<compile_context>
chip_gen: v6e
topology: v6e:2x2x1
jax: 0.10.0
libtpu: 0.0.40
codegen_flags: <defaults>
</compile_context>

<pallas_src>
import math
import functools

import jax
import jax.numpy as jnp
from jax.experimental import pallas as pl
from jax.experimental.pallas import tpu as pltpu


def _encoder_block_kernel(x_ref, g1_ref, wqkv_ref, wo_ref, g2_ref, w13_ref, w2_ref,
                          o_ref, *, n_heads: int, head_dim: int, eps: float):
    S = x_ref.shape[1]
    E = x_ref.shape[2]
    F = w13_ref.shape[1] // 2
    H, Dh = n_heads, head_dim

    x = x_ref[0].astype(jnp.float32)                                      # (S, E)

    # ---- RMSNorm 1 (f32 elementwise) -------------------------------------
    n1 = x * jax.lax.rsqrt(jnp.mean(x * x, axis=-1, keepdims=True) + eps) * g1_ref[...]

    # ---- Fused QKV projection (bf16 operands, f32 accumulation) ----------
    qkv = jnp.dot(n1.astype(jnp.bfloat16), wqkv_ref[...],
                  preferred_element_type=jnp.float32)                     # (S, 3E)

    scale = 1.0 / math.sqrt(Dh)
    # Lane-aligned splits (E is a multiple of 128), one reshape+transpose per tensor.
    q = (qkv[:, 0 * E:1 * E] * scale).reshape(S, H, Dh).transpose(1, 0, 2)  # (H,S,Dh)
    k = qkv[:, 1 * E:2 * E].reshape(S, H, Dh).transpose(1, 0, 2)            # (H,S,Dh)
    v = qkv[:, 2 * E:3 * E].reshape(S, H, Dh).transpose(1, 0, 2)            # (H,S,Dh)

    # ---- Head-batched attention ------------------------------------------
    # Contraction over the last dims: no explicit k.T (no XLU transpose).
    s = jnp.einsum('hqd,hkd->hqk', q.astype(jnp.bfloat16), k.astype(jnp.bfloat16),
                   preferred_element_type=jnp.float32)                    # (H, S, S)
    s = s - jnp.max(s, axis=-1, keepdims=True)
    p = jnp.exp(s)
    p = p * pl.reciprocal(jnp.sum(p, axis=-1, keepdims=True), approx=True)

    ctx = jnp.einsum('hqk,hkd->hqd', p.astype(jnp.bfloat16), v.astype(jnp.bfloat16),
                     preferred_element_type=jnp.float32)                  # (H, S, Dh)
    attn = ctx.transpose(1, 0, 2).reshape(S, E)                           # (S, E)

    attn_out = jnp.dot(attn.astype(jnp.bfloat16), wo_ref[...],
                       preferred_element_type=jnp.float32)                # (S, E)

    # residual 1 (dropout == identity in eval mode)
    x1 = x + attn_out

    # ---- RMSNorm 2 --------------------------------------------------------
    n2 = x1 * jax.lax.rsqrt(jnp.mean(x1 * x1, axis=-1, keepdims=True) + eps) * g2_ref[...]

    # ---- Fused SwiGLU FFN: one (E, 2F) matmul, split at lane-aligned F ----
    h13 = jnp.dot(n2.astype(jnp.bfloat16), w13_ref[...],
                  preferred_element_type=jnp.float32)                     # (S, 2F)
    h1 = h13[:, :F]
    h3 = h13[:, F:]
    g = (h1 * jax.nn.sigmoid(h1)) * h3                                    # SiLU in f32
    ffn = jnp.dot(g.astype(jnp.bfloat16), w2_ref[...],
                  preferred_element_type=jnp.float32)                     # (S, E)

    # residual 2
    o_ref[0] = (x1 + ffn).astype(o_ref.dtype)


def llama_encoder_block(x, kparams, *, n_heads: int, eps: float = 1e-6):
    """x: (B, S, E) float32.  kparams: packed kernel params (see pack_kernel_params)."""
    B, S, E = x.shape
    F = kparams["w2_t"].shape[0]
    head_dim = E // n_heads

    kernel = functools.partial(_encoder_block_kernel,
                               n_heads=n_heads, head_dim=head_dim, eps=eps)

    def const_spec(shape):
        # Whole-array block, constant across the batch grid (loaded once).
        return pl.BlockSpec(shape, lambda b, _s=shape: tuple(0 for _ in _s))

    # Advisory cost estimate (helps XLA overlap surrounding work).
    flops = int(
        2 * B * S * E * (3 * E)                  # fused QKV
        + 4 * B * n_heads * S * S * head_dim     # scores + P@V
        + 2 * B * S * E * E                      # output projection
        + 2 * B * S * E * (2 * F)                # fused w1/w3
        + 2 * B * S * F * E                      # w2
    )
    transcendentals = int(B * n_heads * S * S      # exp
                          + B * n_heads * S        # reciprocal
                          + 2 * B * S              # rsqrt
                          + B * S * F)             # sigmoid
    bytes_accessed = int(
        2 * B * S * E * 4                                      # x in + out (f32)
        + (E * 3 * E + E * E + E * 2 * F + F * E) * 2          # bf16 weights
        + 2 * E * 4                                            # norm gains
    )
    cost = pl.CostEstimate(flops=flops, transcendentals=transcendentals,
                           bytes_accessed=bytes_accessed)

    return pl.pallas_call(
        kernel,
        out_shape=jax.ShapeDtypeStruct((B, S, E), x.dtype),
        grid=(B,),
        in_specs=[
            pl.BlockSpec((1, S, E), lambda b: (b, 0, 0)),   # x (one batch row)
            const_spec((1, E)),                             # g1 (RMSNorm1 weight)
            const_spec((E, 3 * E)),                         # fused [Wq|Wk|Wv]^T  (bf16)
            const_spec((E, E)),                             # Wo^T                (bf16)
            const_spec((1, E)),                             # g2 (RMSNorm2 weight)
            const_spec((E, 2 * F)),                         # fused [w1|w3]^T     (bf16)
            const_spec((F, E)),                             # w2^T                (bf16)
        ],
        out_specs=pl.BlockSpec((1, S, E), lambda b: (b, 0, 0)),
        compiler_params=pltpu.CompilerParams(dimension_semantics=("parallel",)),
        cost_estimate=cost,
    )(x, kparams["g1"], kparams["wqkv_t"], kparams["wo_t"], kparams["g2"],
      kparams["w13_t"], kparams["w2_t"])


def xlstm_wrapper_forward(x, kparams, *, n_heads: int, eps: float = 1e-6, hidden=None):
    """Mirrors XLSTMWrapper.forward: returns (stack(x), None)."""
    x_out = llama_encoder_block(x, kparams, n_heads=n_heads, eps=eps)
    return x_out, None


# ---------------------------------------------------------------------------
# Parameters (canonical PyTorch-shaped f32) and packed kernel params.
# ---------------------------------------------------------------------------
def make_params(key, embed_dim, n_heads, ffn_dim):
    ks = jax.random.split(key, 5)
    std = 0.02
    # nn.MultiheadAttention-style: in_proj (3E, E), out_proj (E, E); bias-free.
    in_proj = jax.random.normal(ks[0], (3 * embed_dim, embed_dim), jnp.float32) * std
    wo = jax.random.normal(ks[1], (embed_dim, embed_dim), jnp.float32) * std
    # SwiGLU FFN: w1 (F, E), w3 (F, E), w2 (E, F)
    w1 = jax.random.normal(ks[2], (ffn_dim, embed_dim), jnp.float32) * std
    w3 = jax.random.normal(ks[3], (ffn_dim, embed_dim), jnp.float32) * std
    w2 = jax.random.normal(ks[4], (embed_dim, ffn_dim), jnp.float32) * std
    return {
        "g1": jnp.ones((embed_dim,), jnp.float32),   # RMSNorm init = ones
        "g2": jnp.ones((embed_dim,), jnp.float32),
        "in_proj": in_proj, "wo": wo, "w1": w1, "w3": w3, "w2": w2,
    }


def pack_kernel_params(p):
    """Pre-transpose, fuse QKV / w1-w3, and cast weights to bf16 for the MXU."""
    wq, wk, wv = jnp.split(p["in_proj"], 3, axis=0)                 # each (E, E)
    wqkv_t = jnp.concatenate([wq.T, wk.T, wv.T], axis=1)            # (E, 3E)
    w13_t = jnp.concatenate([p["w1"].T, p["w3"].T], axis=1)         # (E, 2F)
    return {
        "g1": p["g1"].reshape(1, -1).astype(jnp.float32),
        "g2": p["g2"].reshape(1, -1).astype(jnp.float32),
        "wqkv_t": wqkv_t.astype(jnp.bfloat16),
        "wo_t": p["wo"].T.astype(jnp.bfloat16),
        "w13_t": w13_t.astype(jnp.bfloat16),
        "w2_t": p["w2"].T.astype(jnp.bfloat16),
    }


# ---------------------------------------------------------------------------
# Pure-JAX f32 reference of the PyTorch forward (eval mode).
# ---------------------------------------------------------------------------
def _reference(x, p, n_heads, eps=1e-6):
    B, S, E = x.shape
    hd = E // n_heads

    def rms(v, g):
        return v * jax.lax.rsqrt(jnp.mean(v * v, -1, keepdims=True) + eps) * g

    n1 = rms(x, p["g1"])
    wq, wk, wv = jnp.split(p["in_proj"], 3, axis=0)
    q = n1 @ wq.T
    k = n1 @ wk.T
    v = n1 @ wv.T
    q = q.reshape(B, S, n_heads, hd).transpose(0, 2, 1, 3)
    k = k.reshape(B, S, n_heads, hd).transpose(0, 2, 1, 3)
    v = v.reshape(B, S, n_heads, hd).transpose(0, 2, 1, 3)
    s = jnp.einsum("bhqd,bhkd->bhqk", q, k) / math.sqrt(hd)
    prob = jax.nn.softmax(s, axis=-1)
    a = jnp.einsum("bhqk,bhkd->bhqd", prob, v).transpose(0, 2, 1, 3).reshape(B, S, E)
    x1 = x + a @ p["wo"].T
    n2 = rms(x1, p["g2"])
    h1 = n2 @ p["w1"].T
    h3 = n2 @ p["w3"].T
    return x1 + (jax.nn.silu(h1) * h3) @ p["w2"].T


if __name__ == "__main__":
    # Small but lane-dense shapes: E = 128 keeps every store an unmasked full-width vst.
    B, S, E = 2, 8, 128
    N_HEADS = 4
    FFN_DIM = 256

    key = jax.random.PRNGKey(0)
    kx, kp = jax.random.split(key)
    x = jax.random.normal(kx, (B, S, E), jnp.float32)
    params = make_params(kp, E, N_HEADS, FFN_DIM)
    kparams = pack_kernel_params(params)

    out, hidden = xlstm_wrapper_forward(x, kparams, n_heads=N_HEADS)
    out = jax.block_until_ready(out)

    ref = _reference(x, params, N_HEADS)
    assert out.shape == (B, S, E)
    assert hidden is None
    # bf16 MXU operands + approx reciprocal -> looser tolerance than pure f32.
    max_err = float(jnp.max(jnp.abs(out - ref)))
    assert jnp.allclose(out, ref, atol=2e-2, rtol=2e-2), f"mismatch vs reference (max abs err {max_err})"

    print("KERNEL_OK")
</pallas_src>

<mosaic_0001>
module attributes {stable_mosaic.version = 11 : i64} {
  func.func @_encoder_block_kernel(%arg0: i32, %arg1: memref<1x8x128xf32, #tpu.memory_space<vmem>>, %arg2: memref<1x128xf32, #tpu.memory_space<vmem>>, %arg3: memref<128x384xbf16, #tpu.memory_space<vmem>>, %arg4: memref<128x128xbf16, #tpu.memory_space<vmem>>, %arg5: memref<1x128xf32, #tpu.memory_space<vmem>>, %arg6: memref<128x512xbf16, #tpu.memory_space<vmem>>, %arg7: memref<256x128xbf16, #tpu.memory_space<vmem>>, %arg8: memref<1x8x128xf32, #tpu.memory_space<vmem>>) attributes {dimension_semantics = [#tpu.dimension_semantics<parallel>], iteration_bounds = array<i64: 2>, scalar_prefetch = 0 : i64, scratch_operands = 0 : i64, tpu.core_type = #tpu.core_type<tc>, window_params = [{transform_indices = @transform_0, window_bounds = array<i64: 1, 8, 128>}, {pipeline_mode = #tpu.pipeline_mode<synchronous>, transform_indices = @transform_1, window_bounds = array<i64: 1, 128>}, {pipeline_mode = #tpu.pipeline_mode<synchronous>, transform_indices = @transform_2, window_bounds = array<i64: 128, 384>}, {pipeline_mode = #tpu.pipeline_mode<synchronous>, transform_indices = @transform_3, window_bounds = array<i64: 128, 128>}, {pipeline_mode = #tpu.pipeline_mode<synchronous>, transform_indices = @transform_4, window_bounds = array<i64: 1, 128>}, {pipeline_mode = #tpu.pipeline_mode<synchronous>, transform_indices = @transform_5, window_bounds = array<i64: 128, 512>}, {pipeline_mode = #tpu.pipeline_mode<synchronous>, transform_indices = @transform_6, window_bounds = array<i64: 256, 128>}, {transform_indices = @transform_7, window_bounds = array<i64: 1, 8, 128>}]} {
    %c0 = arith.constant 0 : index
    %c0_0 = arith.constant 0 : index
    %c0_1 = arith.constant 0 : index
    %0 = vector.load %arg1[%c0, %c0_0, %c0_1] : memref<1x8x128xf32, #tpu.memory_space<vmem>>, vector<1x8x128xf32>
    %1 = vector.shape_cast %0 : vector<1x8x128xf32> to vector<8x128xf32>
    %2 = arith.mulf %1, %1 : vector<8x128xf32>
    %cst = arith.constant dense<0.000000e+00> : vector<8xf32>
    %3 = vector.multi_reduction <add>, %2, %cst [1] : vector<8x128xf32> to vector<8xf32>
    %4 = vector.shape_cast %3 : vector<8xf32> to vector<8x1xf32>
    %cst_2 = arith.constant 1.280000e+02 : f32
    %5 = vector.broadcast %cst_2 : f32 to vector<8x1xf32>
    %6 = arith.divf %4, %5 : vector<8x1xf32>
    %cst_3 = arith.constant 9.99999997E-7 : f32
    %7 = vector.broadcast %cst_3 : f32 to vector<8x1xf32>
    %8 = arith.addf %6, %7 : vector<8x1xf32>
    %9 = math.rsqrt %8 : vector<8x1xf32>
    %10 = vector.broadcast %9 : vector<8x1xf32> to vector<8x128xf32>
    %11 = arith.mulf %1, %10 : vector<8x128xf32>
    %c0_4 = arith.constant 0 : index
    %c0_5 = arith.constant 0 : index
    %12 = vector.load %arg2[%c0_4, %c0_5] : memref<1x128xf32, #tpu.memory_space<vmem>>, vector<1x128xf32>
    %13 = vector.broadcast %12 : vector<1x128xf32> to vector<8x128xf32>
    %14 = arith.mulf %11, %13 : vector<8x128xf32>
    %15 = arith.truncf %14 : vector<8x128xf32> to vector<8x128xbf16>
    %c0_6 = arith.constant 0 : index
    %c0_7 = arith.constant 0 : index
    %16 = vector.load %arg3[%c0_6, %c0_7] : memref<128x384xbf16, #tpu.memory_space<vmem>>, vector<128x384xbf16>
    %cst_8 = arith.constant dense<0.000000e+00> : vector<8x384xf32>
    %17 = tpu.matmul %15, %16, %cst_8 {dimension_numbers = #tpu.dot_dimension_numbers<[1], [0], [0], [1], [0, 0, 1, 1], [], []>} : vector<8x128xbf16>, vector<128x384xbf16>, vector<8x384xf32> -> vector<8x384xf32>
    %18 = vector.extract_strided_slice %17 {offsets = [0, 0], sizes = [8, 128], strides = [1, 1]} : vector<8x384xf32> to vector<8x128xf32>
    %cst_9 = arith.constant 0.176776692 : f32
    %19 = vector.broadcast %cst_9 : f32 to vector<8x128xf32>
    %20 = arith.mulf %18, %19 : vector<8x128xf32>
    %21 = vector.shape_cast %20 : vector<8x128xf32> to vector<8x4x32xf32>
    %22 = tpu.transpose %21, [1, 0, 2] : vector<8x4x32xf32> -> vector<4x8x32xf32>
    %23 = vector.extract_strided_slice %17 {offsets = [0, 128], sizes = [8, 128], strides = [1, 1]} : vector<8x384xf32> to vector<8x128xf32>
    %24 = vector.shape_cast %23 : vector<8x128xf32> to vector<8x4x32xf32>
    %25 = tpu.transpose %24, [1, 0, 2] : vector<8x4x32xf32> -> vector<4x8x32xf32>
    %26 = vector.extract_strided_slice %17 {offsets = [0, 256], sizes = [8, 128], strides = [1, 1]} : vector<8x384xf32> to vector<8x128xf32>
    %27 = vector.shape_cast %26 : vector<8x128xf32> to vector<8x4x32xf32>
    %28 = tpu.transpose %27, [1, 0, 2] : vector<8x4x32xf32> -> vector<4x8x32xf32>
    %29 = arith.truncf %22 : vector<4x8x32xf32> to vector<4x8x32xbf16>
    %30 = arith.truncf %25 : vector<4x8x32xf32> to vector<4x8x32xbf16>
    "tpu.trace_start"() <{level = 10 : i32, message = "hqd,hkd->hqk"}> : () -> ()
    %cst_10 = arith.constant dense<0.000000e+00> : vector<4x8x8xf32>
    %31 = tpu.matmul %29, %30, %cst_10 {dimension_numbers = #tpu.dot_dimension_numbers<[2], [2], [1], [1], [0, 0, 0, 1, 1, 1], [0], [0]>} : vector<4x8x32xbf16>, vector<4x8x32xbf16>, vector<4x8x8xf32> -> vector<4x8x8xf32>
    "tpu.trace_stop"() : () -> ()
    %cst_11 = arith.constant dense<0xFF800000> : vector<4x8xf32>
    %32 = vector.multi_reduction <maximumf>, %31, %cst_11 [2] : vector<4x8x8xf32> to vector<4x8xf32>
    %33 = vector.shape_cast %32 : vector<4x8xf32> to vector<4x8x1xf32>
    %34 = vector.broadcast %33 : vector<4x8x1xf32> to vector<4x8x8xf32>
    %35 = arith.subf %31, %34 : vector<4x8x8xf32>
    %36 = math.exp %35 : vector<4x8x8xf32>
    %cst_12 = arith.constant dense<0.000000e+00> : vector<4x8xf32>
    %37 = vector.multi_reduction <add>, %36, %cst_12 [2] : vector<4x8x8xf32> to vector<4x8xf32>
    %38 = vector.shape_cast %37 : vector<4x8xf32> to vector<4x8x1xf32>
    %39 = tpu.reciprocal %38 {approx = true} : vector<4x8x1xf32> -> vector<4x8x1xf32>
    %40 = vector.broadcast %39 : vector<4x8x1xf32> to vector<4x8x8xf32>
    %41 = arith.mulf %36, %40 : vector<4x8x8xf32>
    %42 = arith.truncf %41 : vector<4x8x8xf32> to vector<4x8x8xbf16>
    %43 = arith.truncf %28 : vector<4x8x32xf32> to vector<4x8x32xbf16>
    "tpu.trace_start"() <{level = 10 : i32, message = "hqk,hkd->hqd"}> : () -> ()
    %cst_13 = arith.constant dense<0.000000e+00> : vector<4x8x32xf32>
    %44 = tpu.matmul %42, %43, %cst_13 {dimension_numbers = #tpu.dot_dimension_numbers<[2], [1], [1], [2], [0, 0, 0, 1, 1, 2], [0], [0]>} : vector<4x8x8xbf16>, vector<4x8x32xbf16>, vector<4x8x32xf32> -> vector<4x8x32xf32>
    "tpu.trace_stop"() : () -> ()
    %45 = tpu.transpose %44, [1, 0, 2] : vector<4x8x32xf32> -> vector<8x4x32xf32>
    %46 = vector.shape_cast %45 : vector<8x4x32xf32> to vector<8x128xf32>
    %47 = arith.truncf %46 : vector<8x128xf32> to vector<8x128xbf16>
    %c0_14 = arith.constant 0 : index
    %c0_15 = arith.constant 0 : index
    %48 = vector.load %arg4[%c0_14, %c0_15] : memref<128x128xbf16, #tpu.memory_space<vmem>>, vector<128x128xbf16>
    %cst_16 = arith.constant dense<0.000000e+00> : vector<8x128xf32>
    %49 = tpu.matmul %47, %48, %cst_16 {dimension_numbers = #tpu.dot_dimension_numbers<[1], [0], [0], [1], [0, 0, 1, 1], [], []>} : vector<8x128xbf16>, vector<128x128xbf16>, vector<8x128xf32> -> vector<8x128xf32>
    %50 = arith.addf %1, %49 : vector<8x128xf32>
    %51 = arith.mulf %50, %50 : vector<8x128xf32>
    %cst_17 = arith.constant dense<0.000000e+00> : vector<8xf32>
    %52 = vector.multi_reduction <add>, %51, %cst_17 [1] : vector<8x128xf32> to vector<8xf32>
    %53 = vector.shape_cast %52 : vector<8xf32> to vector<8x1xf32>
    %cst_18 = arith.constant 1.280000e+02 : f32
    %54 = vector.broadcast %cst_18 : f32 to vector<8x1xf32>
    %55 = arith.divf %53, %54 : vector<8x1xf32>
    %cst_19 = arith.constant 9.99999997E-7 : f32
    %56 = vector.broadcast %cst_19 : f32 to vector<8x1xf32>
    %57 = arith.addf %55, %56 : vector<8x1xf32>
    %58 = math.rsqrt %57 : vector<8x1xf32>
    %59 = vector.broadcast %58 : vector<8x1xf32> to vector<8x128xf32>
    %60 = arith.mulf %50, %59 : vector<8x128xf32>
    %c0_20 = arith.constant 0 : index
    %c0_21 = arith.constant 0 : index
    %61 = vector.load %arg5[%c0_20, %c0_21] : memref<1x128xf32, #tpu.memory_space<vmem>>, vector<1x128xf32>
    %62 = vector.broadcast %61 : vector<1x128xf32> to vector<8x128xf32>
    %63 = arith.mulf %60, %62 : vector<8x128xf32>
    %64 = arith.truncf %63 : vector<8x128xf32> to vector<8x128xbf16>
    %c0_22 = arith.constant 0 : index
    %c0_23 = arith.constant 0 : index
    %65 = vector.load %arg6[%c0_22, %c0_23] : memref<128x512xbf16, #tpu.memory_space<vmem>>, vector<128x512xbf16>
    %cst_24 = arith.constant dense<0.000000e+00> : vector<8x512xf32>
    %66 = tpu.matmul %64, %65, %cst_24 {dimension_numbers = #tpu.dot_dimension_numbers<[1], [0], [0], [1], [0, 0, 1, 1], [], []>} : vector<8x128xbf16>, vector<128x512xbf16>, vector<8x512xf32> -> vector<8x512xf32>
    %67 = vector.extract_strided_slice %66 {offsets = [0, 0], sizes = [8, 256], strides = [1, 1]} : vector<8x512xf32> to vector<8x256xf32>
    %68 = vector.extract_strided_slice %66 {offsets = [0, 256], sizes = [8, 256], strides = [1, 1]} : vector<8x512xf32> to vector<8x256xf32>
    %69 = arith.negf %67 : vector<8x256xf32>
    %70 = math.exp %69 : vector<8x256xf32>
    %cst_25 = arith.constant 1.000000e+00 : f32
    %71 = vector.broadcast %cst_25 : f32 to vector<8x256xf32>
    %72 = arith.addf %71, %70 : vector<8x256xf32>
    %73 = arith.divf %71, %72 : vector<8x256xf32>
    %74 = arith.mulf %67, %73 : vector<8x256xf32>
    %75 = arith.mulf %74, %68 : vector<8x256xf32>
    %76 = arith.truncf %75 : vector<8x256xf32> to vector<8x256xbf16>
    %c0_26 = arith.constant 0 : index
    %c0_27 = arith.constant 0 : index
    %77 = vector.load %arg7[%c0_26, %c0_27] : memref<256x128xbf16, #tpu.memory_space<vmem>>, vector<256x128xbf16>
    %cst_28 = arith.constant dense<0.000000e+00> : vector<8x128xf32>
    %78 = tpu.matmul %76, %77, %cst_28 {dimension_numbers = #tpu.dot_dimension_numbers<[1], [0], [0], [1], [0, 0, 1, 1], [], []>} : vector<8x256xbf16>, vector<256x128xbf16>, vector<8x128xf32> -> vector<8x128xf32>
    %79 = arith.addf %50, %78 : vector<8x128xf32>
    %c0_29 = arith.constant 0 : index
    %c0_30 = arith.constant 0 : index
    %c0_31 = arith.constant 0 : index
    %80 = vector.load %arg8[%c0_29, %c0_30, %c0_31] : memref<1x8x128xf32, #tpu.memory_space<vmem>>, vector<1x8x128xf32>
    %81 = vector.shape_cast %80 : vector<1x8x128xf32> to vector<8x128xf32>
    %82 = vector.shape_cast %79 : vector<8x128xf32> to vector<1x8x128xf32>
    tpu.vector_store %arg8[%c0_29, %c0_30, %c0_31], %82 {strides = array<i32>} : memref<1x8x128xf32, #tpu.memory_space<vmem>>, vector<1x8x128xf32>,
    return
  }
  func.func @transform_0(%arg0: i32) -> (i32, i32, i32) {
    %c0_i32 = arith.constant 0 : i32
    %c0_i32_0 = arith.constant 0 : i32
    %c0_i32_1 = arith.constant 0 : i32
    return %arg0, %c0_i32, %c0_i32_0 : i32, i32, i32
  }
  func.func @transform_1(%arg0: i32) -> (i32, i32) {
    %c0_i32 = arith.constant 0 : i32
    %c0_i32_0 = arith.constant 0 : i32
    %c0_i32_1 = arith.constant 0 : i32
    return %c0_i32, %c0_i32_0 : i32, i32
  }
  func.func @transform_2(%arg0: i32) -> (i32, i32) {
    %c0_i32 = arith.constant 0 : i32
    %c0_i32_0 = arith.constant 0 : i32
    %c0_i32_1 = arith.constant 0 : i32
    return %c0_i32, %c0_i32_0 : i32, i32
  }
  func.func @transform_3(%arg0: i32) -> (i32, i32) {
    %c0_i32 = arith.constant 0 : i32
    %c0_i32_0 = arith.constant 0 : i32
    %c0_i32_1 = arith.constant 0 : i32
    return %c0_i32, %c0_i32_0 : i32, i32
  }
  func.func @transform_4(%arg0: i32) -> (i32, i32) {
    %c0_i32 = arith.constant 0 : i32
    %c0_i32_0 = arith.constant 0 : i32
    %c0_i32_1 = arith.constant 0 : i32
    return %c0_i32, %c0_i32_0 : i32, i32
  }
  func.func @transform_5(%arg0: i32) -> (i32, i32) {
    %c0_i32 = arith.constant 0 : i32
    %c0_i32_0 = arith.constant 0 : i32
    %c0_i32_1 = arith.constant 0 : i32
    return %c0_i32, %c0_i32_0 : i32, i32
  }
  func.func @transform_6(%arg0: i32) -> (i32, i32) {
    %c0_i32 = arith.constant 0 : i32
    %c0_i32_0 = arith.constant 0 : i32
    %c0_i32_1 = arith.constant 0 : i32
    return %c0_i32, %c0_i32_0 : i32, i32
  }
  func.func @transform_7(%arg0: i32) -> (i32, i32, i32) {
    %c0_i32 = arith.constant 0 : i32
    %c0_i32_0 = arith.constant 0 : i32
    %c0_i32_1 = arith.constant 0 : i32
    return %arg0, %c0_i32, %c0_i32_0 : i32, i32, i32
  }
}

</mosaic_0001>

<llo_original>
// kernel: tpu_custom_call.1
$region0: #{tpu_custom_call.1}
  #allocation0 [shape = 'u32[]', space=smem, size = 0x4, offset = 0x4, fixed_abs, tag = 'smem constant byte address 0x4 - core index']
  #allocation1 [shape = 'u32[144,128]{1,0:T(1,128)}', space=vmem, size = 0x12000, scoped, tag = 'internal scratch']
  %s0 = inlined_call_operand.hbm [shape: f32[2,8,128], index: 0, kind: input, shape index: {}]
  %s1 = inlined_call_operand.vmem [shape: f32[1,128], index: 1, kind: input, shape index: {}]
  %s2 = inlined_call_operand.hbm [shape: bf16[128,384], index: 2, kind: input, shape index: {}]
  %s3 = inlined_call_operand.hbm [shape: bf16[128,128], index: 3, kind: input, shape index: {}]
  %s4 = inlined_call_operand.vmem [shape: f32[1,128], index: 4, kind: input, shape index: {}]
  %s5 = inlined_call_operand.hbm [shape: bf16[128,512], index: 5, kind: input, shape index: {}]
  %s6 = inlined_call_operand.hbm [shape: bf16[256,128], index: 6, kind: input, shape index: {}]
  %s7 = inlined_call_operand.hbm [shape: f32[2,8,128], index: 7, kind: output, shape index: {}]
  %s8 = sld [smem:[#allocation0]]
  $region81: #{tpu_custom_call.1} parent=0
    _
  %s10 = ssub.s32 1, %s8
  %s11 = scalar_select 0, %s10, %s8
  $region1: #{tpu_custom_call.1} parent=0
    #allocation2 [shape = 'u8[8192]{0}', space=vmem, size = 0x2000, scoped, tag = 'input window, operand 0']
    #allocation3 [shape = 's32[2]{0}', space=sflag, size = 0x8, scoped, tag = 'scoped memory for tpu_custom_call.1']
    #allocation4 [shape = 's32[2]{0}', space=sflag, size = 0x8, scoped, tag = 'scoped memory for tpu_custom_call.1']
    #allocation5 [shape = 'u8[98304]{0}', space=vmem, size = 0x18000, scoped, tag = 'input window, operand 2, single buffered']
    #allocation6 [shape = 's32[1]{0}', space=sflag, size = 0x4, scoped, tag = 'scoped memory for tpu_custom_call.1']
    #allocation7 [shape = 'u8[32768]{0}', space=vmem, size = 0x8000, scoped, tag = 'input window, operand 3, single buffered']
    #allocation8 [shape = 'u8[131072]{0}', space=vmem, size = 0x20000, scoped, tag = 'input window, operand 5, single buffered']
    #allocation9 [shape = 's32[1]{0}', space=sflag, size = 0x4, scoped, tag = 'scoped memory for tpu_custom_call.1']
    #allocation10 [shape = 'u8[65536]{0}', space=vmem, size = 0x10000, scoped, tag = 'input window, operand 6, single buffered']
    #allocation11 [shape = 'u8[8192]{0}', space=vmem, size = 0x2000, scoped, tag = 'output window, operand 0']
    %12 = vsyncpa [#allocation3], 0
    %s13 = scalar_lea.sflag [#allocation3], 1
    %14 = vsyncpa %s13, 0
    %15 = vsyncpa [#allocation6], 0
    %16 = vsyncpa [#allocation9], 0
    %17 = vsyncpa [#allocation4], 0
    %s18 = scalar_lea.sflag [#allocation4], 1
    %19 = vsyncpa %s18, 0
    loop: start=0, step=1, limit=4
    $region2: #{tpu_custom_call.1} parent=1 // loop_pre_header
      _
    $region3: #{tpu_custom_call.1} parent=1 // loop_header
      %s21 = sphi 0, %s25
      %p22 = scmp.ge.s32.totalorder %s21, 4
      %s31 = sphi 0, %s33
      %s34 = sphi 0, %s31
      %s35 = sphi 0, %s34
      %s51 = sphi 0, %s35
      %s55 = sphi 0, %s55
      %s57 = sphi 0, %s55
      %s58 = sphi 0, %s57
      %s72 = sphi 0, %s58
      %s76 = sphi 0, %s76
      %s78 = sphi 0, %s76
      %s79 = sphi 0, %s78
      %s93 = sphi 0, %s79
      %s97 = sphi 0, %s97
      %s99 = sphi 0, %s97
      %s100 = sphi 0, %s99
      %s114 = sphi 0, %s100
      %s118 = sphi 0, %s118
      %s120 = sphi 0, %s118
      %s121 = sphi 0, %s120
      %s135 = sphi 0, %s121
      %s139 = sphi 0, %s139
      %s141 = sphi 0, %s139
      %s142 = sphi 0, %s141
      %s156 = sphi 0, %s142
      %s160 = sphi 0, %s160
      %s162 = sphi 0, %s160
      %s163 = sphi 0, %s162
      %s177 = sphi 0, %s163
      %s183 = sphi 0, %s185
      %s186 = sphi 0, %s183
      %s187 = sphi 0, %s186
      %s203 = sphi 0, %s187
    $region4: #{tpu_custom_call.1} parent=1 // loop_header_branch
      %24 = sbr.rel (%p22) target = $region8
    $region5: #{tpu_custom_call.1} parent=1 // loop_body
      %s26 = ssub.s32 %s21, 1
      %s27 = ssub.s32 %s21, 2
      %s28 = sadd.s32 %s21, 1
      %s29 = ssub.s32 %s21, %s28
      %p30 = scmp.eq.s32.totalorder %s29, 0
      %s32 = sadd.s32 %s31, 1
      %s33 = scalar_select %p30, %s31, %s32
      %p36 = pneg %p30
      %p37 = scmp.eq.s32.totalorder %s21, 1
      %p38 = por %p36, %p37
      %p39 = scmp.ne.s32.totalorder %s31, %s34
      %p40 = scmp.eq.s32.totalorder %s21, 0
      %p41 = por %p39, %p40
      %p42 = scmp.ne.s32.totalorder %s31, %s34
      %p43 = scmp.eq.s32.totalorder %s26, 1
      %p44 = por %p42, %p43
      %p45 = scmp.ne.s32.totalorder %s34, %s35
      %p46 = scmp.eq.s32.totalorder %s26, 0
      %p47 = por %p45, %p46
      %p48 = scmp.ne.s32.totalorder %s34, %s35
      %p49 = scmp.eq.s32.totalorder %s27, 1
      %p50 = por %p48, %p49
      %p52 = scmp.ne.s32.totalorder %s35, %s51
      %p53 = scmp.eq.s32.totalorder %s27, 0
      %p54 = por %p52, %p53
      %s56 = sadd.s32 %s55, 1
      %p59 = scmp.eq.s32.totalorder %s21, 1
      %p60 = scmp.ne.s32.totalorder %s55, %s57
      %p61 = scmp.eq.s32.totalorder %s21, 0
      %p62 = por %p60, %p61
      %p63 = scmp.ne.s32.totalorder %s55, %s57
      %p64 = scmp.eq.s32.totalorder %s26, 1
      %p65 = por %p63, %p64
      %p66 = scmp.ne.s32.totalorder %s57, %s58
      %p67 = scmp.eq.s32.totalorder %s26, 0
      %p68 = por %p66, %p67
      %p69 = scmp.ne.s32.totalorder %s57, %s58
      %p70 = scmp.eq.s32.totalorder %s27, 1
      %p71 = por %p69, %p70
      %p73 = scmp.ne.s32.totalorder %s58, %s72
      %p74 = scmp.eq.s32.totalorder %s27, 0
      %p75 = por %p73, %p74
      %s77 = sadd.s32 %s76, 1
      %p80 = scmp.eq.s32.totalorder %s21, 1
      %p81 = scmp.ne.s32.totalorder %s76, %s78
      %p82 = scmp.eq.s32.totalorder %s21, 0
      %p83 = por %p81, %p82
      %p84 = scmp.ne.s32.totalorder %s76, %s78
      %p85 = scmp.eq.s32.totalorder %s26, 1
      %p86 = por %p84, %p85
      %p87 = scmp.ne.s32.totalorder %s78, %s79
      %p88 = scmp.eq.s32.totalorder %s26, 0
      %p89 = por %p87, %p88
      %p90 = scmp.ne.s32.totalorder %s78, %s79
      %p91 = scmp.eq.s32.totalorder %s27, 1
      %p92 = por %p90, %p91
      %p94 = scmp.ne.s32.totalorder %s79, %s93
      %p95 = scmp.eq.s32.totalorder %s27, 0
      %p96 = por %p94, %p95
      %s98 = sadd.s32 %s97, 1
      %p101 = scmp.eq.s32.totalorder %s21, 1
      %p102 = scmp.ne.s32.totalorder %s97, %s99
      %p103 = scmp.eq.s32.totalorder %s21, 0
      %p104 = por %p102, %p103
      %p105 = scmp.ne.s32.totalorder %s97, %s99
      %p106 = scmp.eq.s32.totalorder %s26, 1
      %p107 = por %p105, %p106
      %p108 = scmp.ne.s32.totalorder %s99, %s100
      %p109 = scmp.eq.s32.totalorder %s26, 0
      %p110 = por %p108, %p109
      %p111 = scmp.ne.s32.totalorder %s99, %s100
      %p112 = scmp.eq.s32.totalorder %s27, 1
      %p113 = por %p111, %p112
      %p115 = scmp.ne.s32.totalorder %s100, %s114
      %p116 = scmp.eq.s32.totalorder %s27, 0
      %p117 = por %p115, %p116
      %s119 = sadd.s32 %s118, 1
      %p122 = scmp.eq.s32.totalorder %s21, 1
      %p123 = scmp.ne.s32.totalorder %s118, %s120
      %p124 = scmp.eq.s32.totalorder %s21, 0
      %p125 = por %p123, %p124
      %p126 = scmp.ne.s32.totalorder %s118, %s120
      %p127 = scmp.eq.s32.totalorder %s26, 1
      %p128 = por %p126, %p127
      %p129 = scmp.ne.s32.totalorder %s120, %s121
      %p130 = scmp.eq.s32.totalorder %s26, 0
      %p131 = por %p129, %p130
      %p132 = scmp.ne.s32.totalorder %s120, %s121
      %p133 = scmp.eq.s32.totalorder %s27, 1
      %p134 = por %p132, %p133
      %p136 = scmp.ne.s32.totalorder %s121, %s135
      %p137 = scmp.eq.s32.totalorder %s27, 0
      %p138 = por %p136, %p137
      %s140 = sadd.s32 %s139, 1
      %p143 = scmp.eq.s32.totalorder %s21, 1
      %p144 = scmp.ne.s32.totalorder %s139, %s141
      %p145 = scmp.eq.s32.totalorder %s21, 0
      %p146 = por %p144, %p145
      %p147 = scmp.ne.s32.totalorder %s139, %s141
      %p148 = scmp.eq.s32.totalorder %s26, 1
      %p149 = por %p147, %p148
      %p150 = scmp.ne.s32.totalorder %s141, %s142
      %p151 = scmp.eq.s32.totalorder %s26, 0
      %p152 = por %p150, %p151
      %p153 = scmp.ne.s32.totalorder %s141, %s142
      %p154 = scmp.eq.s32.totalorder %s27, 1
      %p155 = por %p153, %p154
      %p157 = scmp.ne.s32.totalorder %s142, %s156
      %p158 = scmp.eq.s32.totalorder %s27, 0
      %p159 = por %p157, %p158
      %s161 = sadd.s32 %s160, 1
      %p164 = scmp.eq.s32.totalorder %s21, 1
      %p165 = scmp.ne.s32.totalorder %s160, %s162
      %p166 = scmp.eq.s32.totalorder %s21, 0
      %p167 = por %p165, %p166
      %p168 = scmp.ne.s32.totalorder %s160, %s162
      %p169 = scmp.eq.s32.totalorder %s26, 1
      %p170 = por %p168, %p169
      %p171 = scmp.ne.s32.totalorder %s162, %s163
      %p172 = scmp.eq.s32.totalorder %s26, 0
      %p173 = por %p171, %p172
      %p174 = scmp.ne.s32.totalorder %s162, %s163
      %p175 = scmp.eq.s32.totalorder %s27, 1
      %p176 = por %p174, %p175
      %p178 = scmp.ne.s32.totalorder %s163, %s177
      %p179 = scmp.eq.s32.totalorder %s27, 0
      %p180 = por %p178, %p179
      %s181 = ssub.s32 %s21, %s28
      %p182 = scmp.eq.s32.totalorder %s181, 0
      %s184 = sadd.s32 %s183, 1
      %s185 = scalar_select %p182, %s183, %s184
      %p188 = pneg %p182
      %p189 = scmp.eq.s32.totalorder %s21, 1
      %p190 = por %p188, %p189
      %p191 = scmp.ne.s32.totalorder %s183, %s186
      %p192 = scmp.eq.s32.totalorder %s21, 0
      %p193 = por %p191, %p192
      %p194 = scmp.ne.s32.totalorder %s183, %s186
      %p195 = scmp.eq.s32.totalorder %s26, 1
      %p196 = por %p194, %p195
      %p197 = scmp.ne.s32.totalorder %s186, %s187
      %p198 = scmp.eq.s32.totalorder %s26, 0
      %p199 = por %p197, %p198
      %p200 = scmp.ne.s32.totalorder %s186, %s187
      %p201 = scmp.eq.s32.totalorder %s27, 1
      %p202 = por %p200, %p201
      %p204 = scmp.ne.s32.totalorder %s187, %s203
      %p205 = scmp.eq.s32.totalorder %s27, 0
      %p206 = por %p204, %p205
      %p207 = scmp.le.s32.totalorder 1, %s21
      %p208 = scmp.lt.s32.totalorder %s21, 3
      %p209 = pnand %p207, %p208
      %p210 = pneg %p209
      // Predicated region
      $region9: #{tpu_custom_call.1} parent=5 // pred_check
        _
      $region10: #{tpu_custom_call.1} parent=5 // pred_check_branch
        %212 = sbr.rel (%p209) target = $region12
      $region11: #{tpu_custom_call.1} parent=5 // pred_region
        %s213 = ssub.s32 %s21, 1
        // Predicated region
        $region13: #{tpu_custom_call.1} parent=11 // pred_check
          %p214 = pneg %p68
        $region14: #{tpu_custom_call.1} parent=11 // pred_check_branch
          %216 = sbr.rel (%p214) target = $region16
        $region15: #{tpu_custom_call.1} parent=11 // pred_region
          _
        $region16: #{tpu_custom_call.1} parent=11 // pred_fallthru
          _
        // Predicated region
        $region17: #{tpu_custom_call.1} parent=11 // pred_check
          %p217 = pneg %p89
        $region18: #{tpu_custom_call.1} parent=11 // pred_check_branch
          %219 = sbr.rel (%p217) target = $region20
        $region19: #{tpu_custom_call.1} parent=11 // pred_region
          %s221 = ssub.s32 3072, 3072
          %222 = vsyncadd [#allocation6], %s221
          %s223 = sshll.u32 [#allocation5], 4
          %s224 = int_to_ptr.vmem [resolvable:$true] %s223
          %229 = dma.hbm_to_vmem [thread:$0]  %s2, 3072, %s224, [#allocation6], 192, 192, 12
        $region20: #{tpu_custom_call.1} parent=11 // pred_fallthru
          _
        // Predicated region
        $region21: #{tpu_custom_call.1} parent=11 // pred_check
          %p230 = pneg %p110
        $region22: #{tpu_custom_call.1} parent=11 // pred_check_branch
          %232 = sbr.rel (%p230) target = $region24
        $region23: #{tpu_custom_call.1} parent=11 // pred_region
          %s234 = ssub.s32 1024, 1024
          %235 = vsyncadd [#allocation6], %s234
          %s236 = sshll.u32 [#allocation7], 4
          %s237 = int_to_ptr.vmem [resolvable:$true] %s236
          %242 = dma.hbm_to_vmem [thread:$0]  %s3, 1024, %s237, [#allocation6], 64, 64, 4
        $region24: #{tpu_custom_call.1} parent=11 // pred_fallthru
          _
        // Predicated region
        $region25: #{tpu_custom_call.1} parent=11 // pred_check
          %p243 = pneg %p131
        $region26: #{tpu_custom_call.1} parent=11 // pred_check_branch
          %245 = sbr.rel (%p243) target = $region28
        $region27: #{tpu_custom_call.1} parent=11 // pred_region
          _
        $region28: #{tpu_custom_call.1} parent=11 // pred_fallthru
          _
        // Predicated region
        $region29: #{tpu_custom_call.1} parent=11 // pred_check
          %p246 = pneg %p152
        $region30: #{tpu_custom_call.1} parent=11 // pred_check_branch
          %248 = sbr.rel (%p246) target = $region32
        $region31: #{tpu_custom_call.1} parent=11 // pred_region
          %s250 = ssub.s32 4096, 4096
          %251 = vsyncadd [#allocation9], %s250
          %s252 = sshll.u32 [#allocation8], 4
          %s253 = int_to_ptr.vmem [resolvable:$true] %s252
          %258 = dma.hbm_to_vmem [thread:$0]  %s5, 4096, %s253, [#allocation9], 256, 256, 16
        $region32: #{tpu_custom_call.1} parent=11 // pred_fallthru
          _
        // Predicated region
        $region33: #{tpu_custom_call.1} parent=11 // pred_check
          %p259 = pneg %p173
        $region34: #{tpu_custom_call.1} parent=11 // pred_check_branch
          %261 = sbr.rel (%p259) target = $region36
        $region35: #{tpu_custom_call.1} parent=11 // pred_region
          %s263 = ssub.s32 2048, 2048
          %264 = vsyncadd [#allocation9], %s263
          %s265 = sshll.u32 [#allocation10], 4
          %s266 = int_to_ptr.vmem [resolvable:$true] %s265
          %271 = dma.hbm_to_vmem [thread:$0]  %s6, 2048, %s266, [#allocation9], 64, 64, 4
        $region36: #{tpu_custom_call.1} parent=11 // pred_fallthru
          _
      $region12: #{tpu_custom_call.1} parent=5 // pred_fallthru
        _
      %p272 = scmp.lt.s32.totalorder %s21, 2
      // Predicated region
      $region37: #{tpu_custom_call.1} parent=5 // pred_check
        %p273 = pneg %p272
      $region38: #{tpu_custom_call.1} parent=5 // pred_check_branch
        %275 = sbr.rel (%p273) target = $region40
      $region39: #{tpu_custom_call.1} parent=5 // pred_region
        // Predicated region
        $region41: #{tpu_custom_call.1} parent=39 // pred_check
          %p276 = pneg %p41
        $region42: #{tpu_custom_call.1} parent=39 // pred_check_branch
          %278 = sbr.rel (%p276) target = $region44
        $region43: #{tpu_custom_call.1} parent=39 // pred_region
          %s279 = sand.u32 %s31, 1
          %s280 = scalar_lea.sflag [#allocation3], %s279
          %s281 = sand.u32 %s31, 1
          %s282 = smul.addr %s281, 8
          %s283 = scalar_lea.vmem [#allocation2], %s282
          %s285 = ssub.s32 128, 128
          %286 = vsyncadd %s280, %s285
          %s287 = smul.addr %s21, 128
          %s288 = scalar_lea.hbm %s0, %s287
          %s290 = sshll.u32 %s283, 4
          %s291 = int_to_ptr.vmem [resolvable:$true] %s290
          %293 = dma.hbm_to_vmem [thread:$0]  %s288, 128, %s291, %s280
        $region44: #{tpu_custom_call.1} parent=39 // pred_fallthru
          _
      $region40: #{tpu_custom_call.1} parent=5 // pred_fallthru
        _
      %p294 = scmp.le.s32.totalorder 1, %s21
      %p295 = scmp.lt.s32.totalorder %s21, 3
      %p296 = pnand %p294, %p295
      %p297 = pneg %p296
      // Predicated region
      $region45: #{tpu_custom_call.1} parent=5 // pred_check
        _
      $region46: #{tpu_custom_call.1} parent=5 // pred_check_branch
        %299 = sbr.rel (%p296) target = $region48
      $region47: #{tpu_custom_call.1} parent=5 // pred_region
        %s300 = ssub.s32 %s21, 1
        %s301 = sand.u32 %s34, 1
        %s302 = scalar_lea.sflag [#allocation3], %s301
        %s303 = sand.u32 %s34, 1
        %s304 = smul.addr %s303, 8
        %s305 = scalar_lea.vmem [#allocation2], %s304
        // Predicated region
        $region49: #{tpu_custom_call.1} parent=47 // pred_check
          %p306 = pneg %p47
        $region50: #{tpu_custom_call.1} parent=47 // pred_check_branch
          %308 = sbr.rel (%p306) target = $region52
        $region51: #{tpu_custom_call.1} parent=47 // pred_region
          %309 = dma.done %s302, 128
        $region52: #{tpu_custom_call.1} parent=47 // pred_fallthru
          _
        // Predicated region
        $region53: #{tpu_custom_call.1} parent=47 // pred_check
          %p310 = pneg %p89
        $region54: #{tpu_custom_call.1} parent=47 // pred_check_branch
          %312 = sbr.rel (%p310) target = $region56
        $region55: #{tpu_custom_call.1} parent=47 // pred_region
          %313 = dma.done [#allocation6], 3072
        $region56: #{tpu_custom_call.1} parent=47 // pred_fallthru
          _
        // Predicated region
        $region57: #{tpu_custom_call.1} parent=47 // pred_check
          %p314 = pneg %p110
        $region58: #{tpu_custom_call.1} parent=47 // pred_check_branch
          %316 = sbr.rel (%p314) target = $region60
        $region59: #{tpu_custom_call.1} parent=47 // pred_region
          %317 = dma.done [#allocation6], 1024
        $region60: #{tpu_custom_call.1} parent=47 // pred_fallthru
          _
        // Predicated region
        $region61: #{tpu_custom_call.1} parent=47 // pred_check
          %p318 = pneg %p152
        $region62: #{tpu_custom_call.1} parent=47 // pred_check_branch
          %320 = sbr.rel (%p318) target = $region64
        $region63: #{tpu_custom_call.1} parent=47 // pred_region
          %321 = dma.done [#allocation9], 4096
        $region64: #{tpu_custom_call.1} parent=47 // pred_fallthru
          _
        // Predicated region
        $region65: #{tpu_custom_call.1} parent=47 // pred_check
          %p322 = pneg %p173
        $region66: #{tpu_custom_call.1} parent=47 // pred_check_branch
          %324 = sbr.rel (%p322) target = $region68
        $region67: #{tpu_custom_call.1} parent=47 // pred_region
          %325 = dma.done [#allocation9], 2048
        $region68: #{tpu_custom_call.1} parent=47 // pred_fallthru
          _
        %s326 = sand.u32 %s34, 1
        %s327 = scalar_lea.sflag [#allocation3], %s326
        %s328 = sand.u32 %s34, 1
        %s329 = smul.addr %s328, 8
        %s330 = scalar_lea.vmem [#allocation2], %s329
        %p331 = pneg %p47
        %p332 = pneg %p44
        %p333 = pneg %p68
        %p334 = pneg %p65
        %p335 = pneg %p89
        %p336 = pneg %p86
        %p337 = pneg %p110
        %p338 = pneg %p107
        %p339 = pneg %p131
        %p340 = pneg %p128
        %p341 = pneg %p152
        %p342 = pneg %p149
        %p343 = pneg %p173
        %p344 = pneg %p170
        %p345 = pneg %p199
        %p346 = pneg %p196
        %s347 = sand.u32 %s186, 1
        %s348 = scalar_lea.sflag [#allocation4], %s347
        %s349 = sand.u32 %s186, 1
        %s350 = smul.addr %s349, 8
        %s351 = scalar_lea.vmem [#allocation11], %s350
        %v353 = vld [vmem:[%s305] sm:$0xff]
        %v354 = vmul.f32 %v353, %v353
        %355 = vadd.xlane.f32.xlu0 %v354
        %v356 = vpop.xlane.xlu0 %355
        %v357 = vrcp.pop 128.0
        %v358 = vmul.f32 %v356, %v357
        %v359 = vadd.f32 %v358, 1e-06
        %v360 = vrsqrt.pop %v359
        %v361 = vmul.f32 %v353, %v360
        %v362 = vld [vmem:[%s1] sm:$0x1]
        %v364 = vlaneseq
        %v365 = vshrl.u32 %v364, 7
        %v366 = vsub.s32 0, %v365
        %v367 = vrot.slane %v362, %v366
        %v369 = vmul.f32 %v361, %v367
        %v370 = vpack.c.bf16 %v369, %v369
        %v371 = vld [vmem:[#allocation5] sm:$0xff]
        %v372 = vld [vmem:[#allocation5 + $0x8] sm:$0xf]
        %v373 = vld [vmem:[#allocation5 + $0xc] sm:$0xff]
        %v374 = vld [vmem:[#allocation5 + $0x14] sm:$0xf]
        %v375 = vld [vmem:[#allocation5 + $0x18] sm:$0xff]
        %v376 = vld [vmem:[#allocation5 + $0x20] sm:$0xf]
        %v377 = vld [vmem:[#allocation5 + $0x24] sm:$0xff]
        %v378 = vld [vmem:[#allocation5 + $0x2c] sm:$0xf]
        %v379 = vld [vmem:[#allocation5 + $0x30] sm:$0xff]
        %v380 = vld [vmem:[#allocation5 + $0x38] sm:$0xf]
        %v381 = vld [vmem:[#allocation5 + $0x3c] sm:$0xff]
        %v382 = vld [vmem:[#allocation5 + $0x44] sm:$0xf]
        %v383 = vld [vmem:[#allocation5 + $0x48] sm:$0xff]
        %v384 = vld [vmem:[#allocation5 + $0x50] sm:$0xf]
        %v385 = vld [vmem:[#allocation5 + $0x54] sm:$0xff]
        %v386 = vld [vmem:[#allocation5 + $0x5c] sm:$0xf]
        %v387 = vld [vmem:[#allocation5 + $0x60] sm:$0xff]
        %v388 = vld [vmem:[#allocation5 + $0x68] sm:$0xf]
        %v389 = vld [vmem:[#allocation5 + $0x6c] sm:$0xff]
        %v390 = vld [vmem:[#allocation5 + $0x74] sm:$0xf]
        %v391 = vld [vmem:[#allocation5 + $0x78] sm:$0xff]
        %v392 = vld [vmem:[#allocation5 + $0x80] sm:$0xf]
        %v393 = vld [vmem:[#allocation5 + $0x84] sm:$0xff]
        %v394 = vld [vmem:[#allocation5 + $0x8c] sm:$0xf]
        %v395 = vld [vmem:[#allocation5 + $0x90] sm:$0xff]
        %v396 = vld [vmem:[#allocation5 + $0x98] sm:$0xf]
        %v397 = vld [vmem:[#allocation5 + $0x9c] sm:$0xff]
        %v398 = vld [vmem:[#allocation5 + $0xa4] sm:$0xf]
        %v399 = vld [vmem:[#allocation5 + $0xa8] sm:$0xff]
        %v400 = vld [vmem:[#allocation5 + $0xb0] sm:$0xf]
        %v401 = vld [vmem:[#allocation5 + $0xb4] sm:$0xff]
        %v402 = vld [vmem:[#allocation5 + $0xbc] sm:$0xf]
        %v435 = vunpack.c.l.b16 %v371
        %v436 = vunpack.c.h.b16 %v371
        %v437 = vunpack.c.l.b16 %v372
        %v438 = vunpack.c.l.b16 %v373
        %v439 = vunpack.c.h.b16 %v373
        %v440 = vunpack.c.l.b16 %v374
        %v441 = vunpack.c.l.b16 %v375
        %v442 = vunpack.c.h.b16 %v375
        %v443 = vunpack.c.l.b16 %v376
        %v444 = vunpack.c.l.b16 %v377
        %v445 = vunpack.c.h.b16 %v377
        %v446 = vunpack.c.l.b16 %v378
        %v447 = vunpack.c.l.b16 %v379
        %v448 = vunpack.c.h.b16 %v379
        %v449 = vunpack.c.l.b16 %v380
        %v450 = vunpack.c.l.b16 %v381
        %v451 = vunpack.c.h.b16 %v381
        %v452 = vunpack.c.l.b16 %v382
        %v453 = vunpack.c.l.b16 %v383
        %v454 = vunpack.c.h.b16 %v383
        %v455 = vunpack.c.l.b16 %v384
        %v456 = vunpack.c.l.b16 %v385
        %v457 = vunpack.c.h.b16 %v385
        %v458 = vunpack.c.l.b16 %v386
        %v459 = vunpack.c.l.b16 %v387
        %v460 = vunpack.c.h.b16 %v387
        %v461 = vunpack.c.l.b16 %v388
        %v462 = vunpack.c.l.b16 %v389
        %v463 = vunpack.c.h.b16 %v389
        %v464 = vunpack.c.l.b16 %v390
        %v465 = vunpack.c.l.b16 %v391
        %v466 = vunpack.c.h.b16 %v391
        %v467 = vunpack.c.l.b16 %v392
        %v468 = vunpack.c.l.b16 %v393
        %v469 = vunpack.c.h.b16 %v393
        %v470 = vunpack.c.l.b16 %v394
        %v471 = vunpack.c.l.b16 %v395
        %v472 = vunpack.c.h.b16 %v395
        %v473 = vunpack.c.l.b16 %v396
        %v474 = vunpack.c.l.b16 %v397
        %v475 = vunpack.c.h.b16 %v397
        %v476 = vunpack.c.l.b16 %v398
        %v477 = vunpack.c.l.b16 %v399
        %v478 = vunpack.c.h.b16 %v399
        %v479 = vunpack.c.l.b16 %v400
        %v480 = vunpack.c.l.b16 %v401
        %v481 = vunpack.c.h.b16 %v401
        %v482 = vunpack.c.l.b16 %v402
        %v483 = vpack.c.b16 %v438, %v435
        %v484 = vpack.c.b16 %v439, %v436
        %v485 = vpack.c.b16 %v440, %v437
        %v486 = vpack.c.b16 %v444, %v441
        %v487 = vpack.c.b16 %v445, %v442
        %v488 = vpack.c.b16 %v446, %v443
        %v489 = vpack.c.b16 %v450, %v447
        %v490 = vpack.c.b16 %v451, %v448
        %v491 = vpack.c.b16 %v452, %v449
        %v492 = vpack.c.b16 %v456, %v453
        %v493 = vpack.c.b16 %v457, %v454
        %v494 = vpack.c.b16 %v458, %v455
        %v495 = vpack.c.b16 %v462, %v459
        %v496 = vpack.c.b16 %v463, %v460
        %v497 = vpack.c.b16 %v464, %v461
        %v498 = vpack.c.b16 %v468, %v465
        %v499 = vpack.c.b16 %v469, %v466
        %v500 = vpack.c.b16 %v470, %v467
        %v501 = vpack.c.b16 %v474, %v471
        %v502 = vpack.c.b16 %v475, %v472
        %v503 = vpack.c.b16 %v476, %v473
        %v504 = vpack.c.b16 %v480, %v477
        %v505 = vpack.c.b16 %v481, %v478
        %v506 = vpack.c.b16 %v482, %v479
        %531 = vmatprep.subr.bf16.mxu0 %v505
        %532 = vmatpush1.bf16.msra.mxu0 %v504
        %533 = vmatprep.subr.bf16.mxu0 %v502
        %534 = vmatpush1.bf16.msra.mxu0 %v501
        %535 = vmatprep.subr.bf16.mxu0 %v499
        %536 = vmatpush1.bf16.msra.mxu0 %v498
        %537 = vmatprep.subr.bf16.mxu0 %v496
        %538 = vmatpush1.bf16.msra.mxu0 %v495
        %539 = vmatprep.subr.bf16.mxu0 %v493
        %540 = vmatpush1.bf16.msra.mxu0 %v492
        %541 = vmatprep.subr.bf16.mxu0 %v490
        %542 = vmatpush1.bf16.msra.mxu0 %v489
        %543 = vmatprep.subr.bf16.mxu0 %v487
        %544 = vmatpush1.bf16.msra.mxu0 %v486
        %545 = vmatprep.subr.bf16.mxu0 %v484
        %546 = vmatpush1.bf16.msra.mxu0 %v483
        %547 = vmatprep.subr.bf16.mxu0 0
        %548 = vmatpush2.bf16.msra.mxu0 0
        %549 = vmatprep.subr.bf16.mxu0 0
        %550 = vmatpush2.bf16.msra.mxu0 0
        %551 = vmatprep.subr.bf16.mxu0 0
        %552 = vmatpush2.bf16.msra.mxu0 0
        %553 = vmatprep.subr.bf16.mxu0 0
        %554 = vmatpush2.bf16.msra.mxu0 0
        %555 = vmatprep.subr.bf16.mxu0 0
        %556 = vmatpush2.bf16.msra.mxu0 0
        %557 = vmatprep.subr.bf16.mxu0 0
        %558 = vmatpush2.bf16.msra.mxu0 0
        %559 = vmatprep.subr.bf16.mxu0 0
        %560 = vmatpush2.bf16.msra.mxu0 0
        %561 = vmatprep.subr.bf16.mxu0 0
        %562 = vmatpush2.bf16.msra.mxu0 0
        %563 = vmatprep.mubr.bf16.mxu0 0
        %564 = vmatmul.mubr.bf16.gmra.mxu0 %v370
        %v565 = vpop.f32.mrf.mxu0
        %v566 = vadd.f32 0.0, %v565
        %v567 = vpop.f32.mrf.mxu0
        %v568 = vadd.f32 0.0, %v567
        %v569 = vpop.f32.mrf.mxu0
        %v570 = vpop.f32.mrf.mxu0
        %571 = vdwg.mxu0
        %572 = vmatprep.subr.bf16.mxu0 0
        %573 = vmatpush1.bf16.msra.mxu0 %v506
        %574 = vmatprep.subr.bf16.mxu0 0
        %575 = vmatpush1.bf16.msra.mxu0 %v503
        %576 = vmatprep.subr.bf16.mxu0 0
        %577 = vmatpush1.bf16.msra.mxu0 %v500
        %578 = vmatprep.subr.bf16.mxu0 0
        %579 = vmatpush1.bf16.msra.mxu0 %v497
        %580 = vmatprep.subr.bf16.mxu0 0
        %581 = vmatpush1.bf16.msra.mxu0 %v494
        %582 = vmatprep.subr.bf16.mxu0 0
        %583 = vmatpush1.bf16.msra.mxu0 %v491
        %584 = vmatprep.subr.bf16.mxu0 0
        %585 = vmatpush1.bf16.msra.mxu0 %v488
        %586 = vmatprep.subr.bf16.mxu0 0
        %587 = vmatpush1.bf16.msra.mxu0 %v485
        %588 = vmatprep.subr.bf16.mxu0 0
        %589 = vmatpush2.bf16.msra.mxu0 0
        %590 = vmatprep.subr.bf16.mxu0 0
        %591 = vmatpush2.bf16.msra.mxu0 0
        %592 = vmatprep.subr.bf16.mxu0 0
        %593 = vmatpush2.bf16.msra.mxu0 0
        %594 = vmatprep.subr.bf16.mxu0 0
        %595 = vmatpush2.bf16.msra.mxu0 0
        %596 = vmatprep.subr.bf16.mxu0 0
        %597 = vmatpush2.bf16.msra.mxu0 0
        %598 = vmatprep.subr.bf16.mxu0 0
        %599 = vmatpush2.bf16.msra.mxu0 0
        %600 = vmatprep.subr.bf16.mxu0 0
        %601 = vmatpush2.bf16.msra.mxu0 0
        %602 = vmatprep.subr.bf16.mxu0 0
        %603 = vmatpush2.bf16.msra.mxu0 0
        %604 = vmatprep.mubr.bf16.mxu0 0
        %605 = vmatmul.mubr.bf16.gmra.mxu0 %v370
        %v606 = vpop.f32.mrf.mxu0
        %v607 = vadd.f32 0.0, %v606
        %v608 = vpop.f32.mrf.mxu0
        %v609 = vpop.f32.mrf.mxu0
        %v610 = vpop.f32.mrf.mxu0
        %611 = vdwg.mxu0
        %v612 = vmul.f32 %v566, 0.17677669
        %614 = vrot.lane.b32.xlu0 %v612, 96
        %v615 = vpop.permute.xlu0 %614
        %617 = vrot.lane.b32.xlu0 %v612, 64
        %v618 = vpop.permute.xlu0 %617
        %620 = vrot.lane.b32.xlu0 %v612, 32
        %v621 = vpop.permute.xlu0 %620
        %v623 = vcombine.low %v612, %v618
        %v624 = vcombine.high %v612, %v618
        %v626 = vunpack.c.l.s4 1983009808
        %v627 = vunpack.c.0.s8 %v626
        %v628 = vlaneseq
        %v629 = vshrl.u32 %v628, 7
        %v630 = vsub.s32 %v627, %v629
        %v631 = vrot.slane %v623, %v630
        %v633 = vunpack.c.l.s4 1983009808
        %v634 = vunpack.c.0.s8 %v633
        %v635 = vlaneseq
        %v636 = vshrl.u32 %v635, 7
        %v637 = vsub.s32 %v634, %v636
        %v638 = vrot.slane %v624, %v637
        %v639 = vcombine.low %v615, %v621
        %v640 = vcombine.high %v615, %v621
        %v642 = vunpack.c.l.s4 1983009808
        %v643 = vunpack.c.0.s8 %v642
        %v644 = vlaneseq
        %v645 = vshrl.u32 %v644, 7
        %v646 = vsub.s32 %v643, %v645
        %v647 = vrot.slane %v639, %v646
        %v649 = vunpack.c.l.s4 1983009808
        %v650 = vunpack.c.0.s8 %v649
        %v651 = vlaneseq
        %v652 = vshrl.u32 %v651, 7
        %v653 = vsub.s32 %v650, %v652
        %v654 = vrot.slane %v640, %v653
        %v655 = vcombine.low %v631, %v647
        %v656 = vcombine.high %v631, %v647
        %v658 = vunpack.c.l.s4 1934713408
        %v659 = vunpack.c.0.s8 %v658
        %v660 = vlaneseq
        %v661 = vshrl.u32 %v660, 7
        %v662 = vsub.s32 %v659, %v661
        %v663 = vrot.slane %v655, %v662
        %v665 = vunpack.c.l.s4 1934713408
        %v666 = vunpack.c.0.s8 %v665
        %v667 = vlaneseq
        %v668 = vshrl.u32 %v667, 7
        %v669 = vsub.s32 %v666, %v668
        %v670 = vrot.slane %v656, %v669
        %v671 = vcombine.low %v638, %v654
        %v672 = vcombine.high %v638, %v654
        %v674 = vunpack.c.l.s4 1934713408
        %v675 = vunpack.c.0.s8 %v674
        %v676 = vlaneseq
        %v677 = vshrl.u32 %v676, 7
        %v678 = vsub.s32 %v675, %v677
        %v679 = vrot.slane %v671, %v678
        %v681 = vunpack.c.l.s4 1934713408
        %v682 = vunpack.c.0.s8 %v681
        %v683 = vlaneseq
        %v684 = vshrl.u32 %v683, 7
        %v685 = vsub.s32 %v682, %v684
        %v686 = vrot.slane %v672, %v685
        %v687 = vcombine.high %v663, 0.0
        %v688 = vcombine.high %v670, 0.0
        %v689 = vcombine.high %v679, 0.0
        %v690 = vcombine.high %v686, 0.0
        %v691 = vcombine.low %v663, %v670
        %v693 = vunpack.c.l.s4 1983009808
        %v694 = vunpack.c.0.s8 %v693
        %v695 = vlaneseq
        %v696 = vshrl.u32 %v695, 7
        %v697 = vsub.s32 %v694, %v696
        %v698 = vrot.slane %v691, %v697
        %v699 = vcombine.low %v687, %v688
        %v701 = vunpack.c.l.s4 1983009808
        %v702 = vunpack.c.0.s8 %v701
        %v703 = vlaneseq
        %v704 = vshrl.u32 %v703, 7
        %v705 = vsub.s32 %v702, %v704
        %v706 = vrot.slane %v699, %v705
        %v707 = vcombine.low %v679, %v686
        %v709 = vunpack.c.l.s4 1983009808
        %v710 = vunpack.c.0.s8 %v709
        %v711 = vlaneseq
        %v712 = vshrl.u32 %v711, 7
        %v713 = vsub.s32 %v710, %v712
        %v714 = vrot.slane %v707, %v713
        %v715 = vcombine.low %v689, %v690
        %v717 = vunpack.c.l.s4 1983009808
        %v718 = vunpack.c.0.s8 %v717
        %v719 = vlaneseq
        %v720 = vshrl.u32 %v719, 7
        %v721 = vsub.s32 %v718, %v720
        %v722 = vrot.slane %v715, %v721
        %v723 = vcombine.low %v698, %v706
        %v724 = vcombine.high %v698, %v706
        %v726 = vunpack.c.l.s4 1934713408
        %v727 = vunpack.c.0.s8 %v726
        %v728 = vlaneseq
        %v729 = vshrl.u32 %v728, 7
        %v730 = vsub.s32 %v727, %v729
        %v731 = vrot.slane %v723, %v730
        %v733 = vunpack.c.l.s4 1934713408
        %v734 = vunpack.c.0.s8 %v733
        %v735 = vlaneseq
        %v736 = vshrl.u32 %v735, 7
        %v737 = vsub.s32 %v734, %v736
        %v738 = vrot.slane %v724, %v737
        %v739 = vcombine.low %v714, %v722
        %v740 = vcombine.high %v714, %v722
        %v742 = vunpack.c.l.s4 1934713408
        %v743 = vunpack.c.0.s8 %v742
        %v744 = vlaneseq
        %v745 = vshrl.u32 %v744, 7
        %v746 = vsub.s32 %v743, %v745
        %v747 = vrot.slane %v739, %v746
        %v749 = vunpack.c.l.s4 1934713408
        %v750 = vunpack.c.0.s8 %v749
        %v751 = vlaneseq
        %v752 = vshrl.u32 %v751, 7
        %v753 = vsub.s32 %v750, %v752
        %v754 = vrot.slane %v740, %v753
        %v755 = vcombine.low %v731, %v747
        %v756 = vcombine.high %v731, %v747
        %v757 = vcombine.low %v738, %v754
        %v758 = vcombine.high %v738, %v754
        %760 = vrot.lane.b32.xlu0 %v568, 96
        %v761 = vpop.permute.xlu0 %760
        %763 = vrot.lane.b32.xlu0 %v568, 64
        %v764 = vpop.permute.xlu0 %763
        %766 = vrot.lane.b32.xlu0 %v568, 32
        %v767 = vpop.permute.xlu0 %766
        %v769 = vcombine.low %v568, %v764
        %v770 = vcombine.high %v568, %v764
        %v772 = vunpack.c.l.s4 1983009808
        %v773 = vunpack.c.0.s8 %v772
        %v774 = vlaneseq
        %v775 = vshrl.u32 %v774, 7
        %v776 = vsub.s32 %v773, %v775
        %v777 = vrot.slane %v769, %v776
        %v779 = vunpack.c.l.s4 1983009808
        %v780 = vunpack.c.0.s8 %v779
        %v781 = vlaneseq
        %v782 = vshrl.u32 %v781, 7
        %v783 = vsub.s32 %v780, %v782
        %v784 = vrot.slane %v770, %v783
        %v785 = vcombine.low %v761, %v767
        %v786 = vcombine.high %v761, %v767
        %v788 = vunpack.c.l.s4 1983009808
        %v789 = vunpack.c.0.s8 %v788
        %v790 = vlaneseq
        %v791 = vshrl.u32 %v790, 7
        %v792 = vsub.s32 %v789, %v791
        %v793 = vrot.slane %v785, %v792
        %v795 = vunpack.c.l.s4 1983009808
        %v796 = vunpack.c.0.s8 %v795
        %v797 = vlaneseq
        %v798 = vshrl.u32 %v797, 7
        %v799 = vsub.s32 %v796, %v798
        %v800 = vrot.slane %v786, %v799
        %v801 = vcombine.low %v777, %v793
        %v802 = vcombine.high %v777, %v793
        %v804 = vunpack.c.l.s4 1934713408
        %v805 = vunpack.c.0.s8 %v804
        %v806 = vlaneseq
        %v807 = vshrl.u32 %v806, 7
        %v808 = vsub.s32 %v805, %v807
        %v809 = vrot.slane %v801, %v808
        %v811 = vunpack.c.l.s4 1934713408
        %v812 = vunpack.c.0.s8 %v811
        %v813 = vlaneseq
        %v814 = vshrl.u32 %v813, 7
        %v815 = vsub.s32 %v812, %v814
        %v816 = vrot.slane %v802, %v815
        %v817 = vcombine.low %v784, %v800
        %v818 = vcombine.high %v784, %v800
        %v820 = vunpack.c.l.s4 1934713408
        %v821 = vunpack.c.0.s8 %v820
        %v822 = vlaneseq
        %v823 = vshrl.u32 %v822, 7
        %v824 = vsub.s32 %v821, %v823
        %v825 = vrot.slane %v817, %v824
        %v827 = vunpack.c.l.s4 1934713408
        %v828 = vunpack.c.0.s8 %v827
        %v829 = vlaneseq
        %v830 = vshrl.u32 %v829, 7
        %v831 = vsub.s32 %v828, %v830
        %v832 = vrot.slane %v818, %v831
        %v833 = vcombine.high %v809, 0.0
        %v834 = vcombine.high %v816, 0.0
        %v835 = vcombine.high %v825, 0.0
        %v836 = vcombine.high %v832, 0.0
        %v837 = vcombine.low %v809, %v816
        %v839 = vunpack.c.l.s4 1983009808
        %v840 = vunpack.c.0.s8 %v839
        %v841 = vlaneseq
        %v842 = vshrl.u32 %v841, 7
        %v843 = vsub.s32 %v840, %v842
        %v844 = vrot.slane %v837, %v843
        %v845 = vcombine.low %v833, %v834
        %v847 = vunpack.c.l.s4 1983009808
        %v848 = vunpack.c.0.s8 %v847
        %v849 = vlaneseq
        %v850 = vshrl.u32 %v849, 7
        %v851 = vsub.s32 %v848, %v850
        %v852 = vrot.slane %v845, %v851
        %v853 = vcombine.low %v825, %v832
        %v855 = vunpack.c.l.s4 1983009808
        %v856 = vunpack.c.0.s8 %v855
        %v857 = vlaneseq
        %v858 = vshrl.u32 %v857, 7
        %v859 = vsub.s32 %v856, %v858
        %v860 = vrot.slane %v853, %v859
        %v861 = vcombine.low %v835, %v836
        %v863 = vunpack.c.l.s4 1983009808
        %v864 = vunpack.c.0.s8 %v863
        %v865 = vlaneseq
        %v866 = vshrl.u32 %v865, 7
        %v867 = vsub.s32 %v864, %v866
        %v868 = vrot.slane %v861, %v867
        %v869 = vcombine.low %v844, %v852
        %v870 = vcombine.high %v844, %v852
        %v872 = vunpack.c.l.s4 1934713408
        %v873 = vunpack.c.0.s8 %v872
        %v874 = vlaneseq
        %v875 = vshrl.u32 %v874, 7
        %v876 = vsub.s32 %v873, %v875
        %v877 = vrot.slane %v869, %v876
        %v879 = vunpack.c.l.s4 1934713408
        %v880 = vunpack.c.0.s8 %v879
        %v881 = vlaneseq
        %v882 = vshrl.u32 %v881, 7
        %v883 = vsub.s32 %v880, %v882
        %v884 = vrot.slane %v870, %v883
        %v885 = vcombine.low %v860, %v868
        %v886 = vcombine.high %v860, %v868
        %v888 = vunpack.c.l.s4 1934713408
        %v889 = vunpack.c.0.s8 %v888
        %v890 = vlaneseq
        %v891 = vshrl.u32 %v890, 7
        %v892 = vsub.s32 %v889, %v891
        %v893 = vrot.slane %v885, %v892
        %v895 = vunpack.c.l.s4 1934713408
        %v896 = vunpack.c.0.s8 %v895
        %v897 = vlaneseq
        %v898 = vshrl.u32 %v897, 7
        %v899 = vsub.s32 %v896, %v898
        %v900 = vrot.slane %v886, %v899
        %v901 = vcombine.low %v877, %v893
        %v902 = vcombine.high %v877, %v893
        %v903 = vcombine.low %v884, %v900
        %v904 = vcombine.high %v884, %v900
        %906 = vrot.lane.b32.xlu0 %v607, 96
        %v907 = vpop.permute.xlu0 %906
        %909 = vrot.lane.b32.xlu0 %v607, 64
        %v910 = vpop.permute.xlu0 %909
        %912 = vrot.lane.b32.xlu0 %v607, 32
        %v913 = vpop.permute.xlu0 %912
        %v915 = vcombine.low %v607, %v910
        %v916 = vcombine.high %v607, %v910
        %v918 = vunpack.c.l.s4 1983009808
        %v919 = vunpack.c.0.s8 %v918
        %v920 = vlaneseq
        %v921 = vshrl.u32 %v920, 7
        %v922 = vsub.s32 %v919, %v921
        %v923 = vrot.slane %v915, %v922
        %v925 = vunpack.c.l.s4 1983009808
        %v926 = vunpack.c.0.s8 %v925
        %v927 = vlaneseq
        %v928 = vshrl.u32 %v927, 7
        %v929 = vsub.s32 %v926, %v928
        %v930 = vrot.slane %v916, %v929
        %v931 = vcombine.low %v907, %v913
        %v932 = vcombine.high %v907, %v913
        %v934 = vunpack.c.l.s4 1983009808
        %v935 = vunpack.c.0.s8 %v934
        %v936 = vlaneseq
        %v937 = vshrl.u32 %v936, 7
        %v938 = vsub.s32 %v935, %v937
        %v939 = vrot.slane %v931, %v938
        %v941 = vunpack.c.l.s4 1983009808
        %v942 = vunpack.c.0.s8 %v941
        %v943 = vlaneseq
        %v944 = vshrl.u32 %v943, 7
        %v945 = vsub.s32 %v942, %v944
        %v946 = vrot.slane %v932, %v945
        %v947 = vcombine.low %v923, %v939
        %v948 = vcombine.high %v923, %v939
        %v950 = vunpack.c.l.s4 1934713408
        %v951 = vunpack.c.0.s8 %v950
        %v952 = vlaneseq
        %v953 = vshrl.u32 %v952, 7
        %v954 = vsub.s32 %v951, %v953
        %v955 = vrot.slane %v947, %v954
        %v957 = vunpack.c.l.s4 1934713408
        %v958 = vunpack.c.0.s8 %v957
        %v959 = vlaneseq
        %v960 = vshrl.u32 %v959, 7
        %v961 = vsub.s32 %v958, %v960
        %v962 = vrot.slane %v948, %v961
        %v963 = vcombine.low %v930, %v946
        %v964 = vcombine.high %v930, %v946
        %v966 = vunpack.c.l.s4 1934713408
        %v967 = vunpack.c.0.s8 %v966
        %v968 = vlaneseq
        %v969 = vshrl.u32 %v968, 7
        %v970 = vsub.s32 %v967, %v969
        %v971 = vrot.slane %v963, %v970
        %v973 = vunpack.c.l.s4 1934713408
        %v974 = vunpack.c.0.s8 %v973
        %v975 = vlaneseq
        %v976 = vshrl.u32 %v975, 7
        %v977 = vsub.s32 %v974, %v976
        %v978 = vrot.slane %v964, %v977
        %v979 = vcombine.high %v955, 0.0
        %v980 = vcombine.high %v962, 0.0
        %v981 = vcombine.high %v971, 0.0
        %v982 = vcombine.high %v978, 0.0
        %v983 = vcombine.low %v955, %v962
        %v985 = vunpack.c.l.s4 1983009808
        %v986 = vunpack.c.0.s8 %v985
        %v987 = vlaneseq
        %v988 = vshrl.u32 %v987, 7
        %v989 = vsub.s32 %v986, %v988
        %v990 = vrot.slane %v983, %v989
        %v991 = vcombine.low %v979, %v980
        %v993 = vunpack.c.l.s4 1983009808
        %v994 = vunpack.c.0.s8 %v993
        %v995 = vlaneseq
        %v996 = vshrl.u32 %v995, 7
        %v997 = vsub.s32 %v994, %v996
        %v998 = vrot.slane %v991, %v997
        %v999 = vcombine.low %v971, %v978
        %v1001 = vunpack.c.l.s4 1983009808
        %v1002 = vunpack.c.0.s8 %v1001
        %v1003 = vlaneseq
        %v1004 = vshrl.u32 %v1003, 7
        %v1005 = vsub.s32 %v1002, %v1004
        %v1006 = vrot.slane %v999, %v1005
        %v1007 = vcombine.low %v981, %v982
        %v1009 = vunpack.c.l.s4 1983009808
        %v1010 = vunpack.c.0.s8 %v1009
        %v1011 = vlaneseq
        %v1012 = vshrl.u32 %v1011, 7
        %v1013 = vsub.s32 %v1010, %v1012
        %v1014 = vrot.slane %v1007, %v1013
        %v1015 = vcombine.low %v990, %v998
        %v1016 = vcombine.high %v990, %v998
        %v1018 = vunpack.c.l.s4 1934713408
        %v1019 = vunpack.c.0.s8 %v1018
        %v1020 = vlaneseq
        %v1021 = vshrl.u32 %v1020, 7
        %v1022 = vsub.s32 %v1019, %v1021
        %v1023 = vrot.slane %v1015, %v1022
        %v1025 = vunpack.c.l.s4 1934713408
        %v1026 = vunpack.c.0.s8 %v1025
        %v1027 = vlaneseq
        %v1028 = vshrl.u32 %v1027, 7
        %v1029 = vsub.s32 %v1026, %v1028
        %v1030 = vrot.slane %v1016, %v1029
        %v1031 = vcombine.low %v1006, %v1014
        %v1032 = vcombine.high %v1006, %v1014
        %v1034 = vunpack.c.l.s4 1934713408
        %v1035 = vunpack.c.0.s8 %v1034
        %v1036 = vlaneseq
        %v1037 = vshrl.u32 %v1036, 7
        %v1038 = vsub.s32 %v1035, %v1037
        %v1039 = vrot.slane %v1031, %v1038
        %v1041 = vunpack.c.l.s4 1934713408
        %v1042 = vunpack.c.0.s8 %v1041
        %v1043 = vlaneseq
        %v1044 = vshrl.u32 %v1043, 7
        %v1045 = vsub.s32 %v1042, %v1044
        %v1046 = vrot.slane %v1032, %v1045
        %v1047 = vcombine.low %v1023, %v1039
        %v1048 = vcombine.high %v1023, %v1039
        %v1049 = vcombine.low %v1030, %v1046
        %v1050 = vcombine.high %v1030, %v1046
        %v1051 = vpack.c.bf16 %v755, %v755
        %v1052 = vpack.c.bf16 %v756, %v756
        %v1053 = vpack.c.bf16 %v757, %v757
        %v1054 = vpack.c.bf16 %v758, %v758
        %v1055 = vpack.c.bf16 %v901, %v901
        %v1056 = vpack.c.bf16 %v902, %v902
        %v1057 = vpack.c.bf16 %v903, %v903
        %v1058 = vpack.c.bf16 %v904, %v904
        %vm1059 = vcmask 261120
        %v1061 = vsel %vm1059, %v1051, 0
        %v1064 = vsel %vm1059, %v1055, 0
        %1066 = vmatprep.subr.bf16.mxu0 0
        %1067 = vmatpush1.bf16.xpose.msra.mxu0 0
        %1068 = vmatprep.subr.bf16.mxu0 0
        %1069 = vmatpush1.bf16.xpose.msra.mxu0 0
        %1070 = vmatprep.subr.bf16.mxu0 0
        %1071 = vmatpush1.bf16.xpose.msra.mxu0 0
        %1072 = vmatprep.subr.bf16.mxu0 0
        %1073 = vmatpush1.bf16.xpose.msra.mxu0 0
        %1074 = vmatprep.subr.bf16.mxu0 0
        %1075 = vmatpush1.bf16.xpose.msra.mxu0 0
        %1076 = vmatprep.subr.bf16.mxu0 0
        %1077 = vmatpush1.bf16.xpose.msra.mxu0 0
        %1078 = vmatprep.subr.bf16.mxu0 0
        %1079 = vmatpush1.bf16.xpose.msra.mxu0 0
        %1080 = vmatprep.subr.bf16.mxu0 0
        %1081 = vmatpush1.bf16.xpose.msra.mxu0 %v1064
        %1082 = vmatprep.subr.bf16.mxu0 0
        %1083 = vmatpush2.bf16.xpose.msra.mxu0 0
        %1084 = vmatprep.subr.bf16.mxu0 0
        %1085 = vmatpush2.bf16.xpose.msra.mxu0 0
        %1086 = vmatprep.subr.bf16.mxu0 0
        %1087 = vmatpush2.bf16.xpose.msra.mxu0 0
        %1088 = vmatprep.subr.bf16.mxu0 0
        %1089 = vmatpush2.bf16.xpose.msra.mxu0 0
        %1090 = vmatprep.subr.bf16.mxu0 0
        %1091 = vmatpush2.bf16.xpose.msra.mxu0 0
        %1092 = vmatprep.subr.bf16.mxu0 0
        %1093 = vmatpush2.bf16.xpose.msra.mxu0 0
        %1094 = vmatprep.subr.bf16.mxu0 0
        %1095 = vmatpush2.bf16.xpose.msra.mxu0 0
        %1096 = vmatprep.subr.bf16.mxu0 0
        %1097 = vmatpush2.bf16.xpose.msra.mxu0 0
        %1098 = vmatprep.mubr.bf16.mxu0 0
        %1099 = vmatmul.mubr.bf16.gmra.mxu0 %v1061
        %v1100 = vpop.f32.mrf.mxu0
        %v1101 = vadd.f32 0.0, %v1100
        %v1102 = vpop.f32.mrf.mxu0
        %v1103 = vpop.f32.mrf.mxu0
        %v1104 = vpop.f32.mrf.mxu0
        %1105 = vdwg.mxu0
        %v1107 = vsel %vm1059, %v1052, 0
        %v1110 = vsel %vm1059, %v1056, 0
        %1112 = vmatprep.subr.bf16.mxu0 0
        %1113 = vmatpush1.bf16.xpose.msra.mxu0 0
        %1114 = vmatprep.subr.bf16.mxu0 0
        %1115 = vmatpush1.bf16.xpose.msra.mxu0 0
        %1116 = vmatprep.subr.bf16.mxu0 0
        %1117 = vmatpush1.bf16.xpose.msra.mxu0 0
        %1118 = vmatprep.subr.bf16.mxu0 0
        %1119 = vmatpush1.bf16.xpose.msra.mxu0 0
        %1120 = vmatprep.subr.bf16.mxu0 0
        %1121 = vmatpush1.bf16.xpose.msra.mxu0 0
        %1122 = vmatprep.subr.bf16.mxu0 0
        %1123 = vmatpush1.bf16.xpose.msra.mxu0 0
        %1124 = vmatprep.subr.bf16.mxu0 0
        %1125 = vmatpush1.bf16.xpose.msra.mxu0 0
        %1126 = vmatprep.subr.bf16.mxu0 0
        %1127 = vmatpush1.bf16.xpose.msra.mxu0 %v1110
        %1128 = vmatprep.subr.bf16.mxu0 0
        %1129 = vmatpush2.bf16.xpose.msra.mxu0 0
        %1130 = vmatprep.subr.bf16.mxu0 0
        %1131 = vmatpush2.bf16.xpose.msra.mxu0 0
        %1132 = vmatprep.subr.bf16.mxu0 0
        %1133 = vmatpush2.bf16.xpose.msra.mxu0 0
        %1134 = vmatprep.subr.bf16.mxu0 0
        %1135 = vmatpush2.bf16.xpose.msra.mxu0 0
        %1136 = vmatprep.subr.bf16.mxu0 0
        %1137 = vmatpush2.bf16.xpose.msra.mxu0 0
        %1138 = vmatprep.subr.bf16.mxu0 0
        %1139 = vmatpush2.bf16.xpose.msra.mxu0 0
        %1140 = vmatprep.subr.bf16.mxu0 0
        %1141 = vmatpush2.bf16.xpose.msra.mxu0 0
        %1142 = vmatprep.subr.bf16.mxu0 0
        %1143 = vmatpush2.bf16.xpose.msra.mxu0 0
        %1144 = vmatprep.mubr.bf16.mxu0 0
        %1145 = vmatmul.mubr.bf16.gmra.mxu0 %v1107
        %v1146 = vpop.f32.mrf.mxu0
        %v1147 = vadd.f32 0.0, %v1146
        %v1148 = vpop.f32.mrf.mxu0
        %v1149 = vpop.f32.mrf.mxu0
        %v1150 = vpop.f32.mrf.mxu0
        %1151 = vdwg.mxu0
        %v1153 = vsel %vm1059, %v1053, 0
        %v1156 = vsel %vm1059, %v1057, 0
        %1158 = vmatprep.subr.bf16.mxu0 0
        %1159 = vmatpush1.bf16.xpose.msra.mxu0 0
        %1160 = vmatprep.subr.bf16.mxu0 0
        %1161 = vmatpush1.bf16.xpose.msra.mxu0 0
        %1162 = vmatprep.subr.bf16.mxu0 0
        %1163 = vmatpush1.bf16.xpose.msra.mxu0 0
        %1164 = vmatprep.subr.bf16.mxu0 0
        %1165 = vmatpush1.bf16.xpose.msra.mxu0 0
        %1166 = vmatprep.subr.bf16.mxu0 0
        %1167 = vmatpush1.bf16.xpose.msra.mxu0 0
        %1168 = vmatprep.subr.bf16.mxu0 0
        %1169 = vmatpush1.bf16.xpose.msra.mxu0 0
        %1170 = vmatprep.subr.bf16.mxu0 0
        %1171 = vmatpush1.bf16.xpose.msra.mxu0 0
        %1172 = vmatprep.subr.bf16.mxu0 0
        %1173 = vmatpush1.bf16.xpose.msra.mxu0 %v1156
        %1174 = vmatprep.subr.bf16.mxu0 0
        %1175 = vmatpush2.bf16.xpose.msra.mxu0 0
        %1176 = vmatprep.subr.bf16.mxu0 0
        %1177 = vmatpush2.bf16.xpose.msra.mxu0 0
        %1178 = vmatprep.subr.bf16.mxu0 0
        %1179 = vmatpush2.bf16.xpose.msra.mxu0 0
        %1180 = vmatprep.subr.bf16.mxu0 0
        %1181 = vmatpush2.bf16.xpose.msra.mxu0 0
        %1182 = vmatprep.subr.bf16.mxu0 0
        %1183 = vmatpush2.bf16.xpose.msra.mxu0 0
        %1184 = vmatprep.subr.bf16.mxu0 0
        %1185 = vmatpush2.bf16.xpose.msra.mxu0 0
        %1186 = vmatprep.subr.bf16.mxu0 0
        %1187 = vmatpush2.bf16.xpose.msra.mxu0 0
        %1188 = vmatprep.subr.bf16.mxu0 0
        %1189 = vmatpush2.bf16.xpose.msra.mxu0 0
        %1190 = vmatprep.mubr.bf16.mxu0 0
        %1191 = vmatmul.mubr.bf16.gmra.mxu0 %v1153
        %v1192 = vpop.f32.mrf.mxu0
        %v1193 = vadd.f32 0.0, %v1192
        %v1194 = vpop.f32.mrf.mxu0
        %v1195 = vpop.f32.mrf.mxu0
        %v1196 = vpop.f32.mrf.mxu0
        %1197 = vdwg.mxu0
        %v1199 = vsel %vm1059, %v1054, 0
        %v1202 = vsel %vm1059, %v1058, 0
        %1204 = vmatprep.subr.bf16.mxu0 0
        %1205 = vmatpush1.bf16.xpose.msra.mxu0 0
        %1206 = vmatprep.subr.bf16.mxu0 0
        %1207 = vmatpush1.bf16.xpose.msra.mxu0 0
        %1208 = vmatprep.subr.bf16.mxu0 0
        %1209 = vmatpush1.bf16.xpose.msra.mxu0 0
        %1210 = vmatprep.subr.bf16.mxu0 0
        %1211 = vmatpush1.bf16.xpose.msra.mxu0 0
        %1212 = vmatprep.subr.bf16.mxu0 0
        %1213 = vmatpush1.bf16.xpose.msra.mxu0 0
        %1214 = vmatprep.subr.bf16.mxu0 0
        %1215 = vmatpush1.bf16.xpose.msra.mxu0 0
        %1216 = vmatprep.subr.bf16.mxu0 0
        %1217 = vmatpush1.bf16.xpose.msra.mxu0 0
        %1218 = vmatprep.subr.bf16.mxu0 0
        %1219 = vmatpush1.bf16.xpose.msra.mxu0 %v1202
        %1220 = vmatprep.subr.bf16.mxu0 0
        %1221 = vmatpush2.bf16.xpose.msra.mxu0 0
        %1222 = vmatprep.subr.bf16.mxu0 0
        %1223 = vmatpush2.bf16.xpose.msra.mxu0 0
        %1224 = vmatprep.subr.bf16.mxu0 0
        %1225 = vmatpush2.bf16.xpose.msra.mxu0 0
        %1226 = vmatprep.subr.bf16.mxu0 0
        %1227 = vmatpush2.bf16.xpose.msra.mxu0 0
        %1228 = vmatprep.subr.bf16.mxu0 0
        %1229 = vmatpush2.bf16.xpose.msra.mxu0 0
        %1230 = vmatprep.subr.bf16.mxu0 0
        %1231 = vmatpush2.bf16.xpose.msra.mxu0 0
        %1232 = vmatprep.subr.bf16.mxu0 0
        %1233 = vmatpush2.bf16.xpose.msra.mxu0 0
        %1234 = vmatprep.subr.bf16.mxu0 0
        %1235 = vmatpush2.bf16.xpose.msra.mxu0 0
        %1236 = vmatprep.mubr.bf16.mxu0 0
        %1237 = vmatmul.mubr.bf16.gmra.mxu0 %v1199
        %v1238 = vpop.f32.mrf.mxu0
        %v1239 = vadd.f32 0.0, %v1238
        %v1240 = vpop.f32.mrf.mxu0
        %v1241 = vpop.f32.mrf.mxu0
        %v1242 = vpop.f32.mrf.mxu0
        %1243 = vdwg.mxu0
        %vm1244 = vcmask 64512
        %v1245 = vsel %vm1244, %v1101, -inf
        %1246 = vmax.xlane.f32.xlu0 %v1245
        %v1247 = vpop.xlane.xlu0 %1246
        %v1248 = vsel %vm1244, %v1147, -inf
        %1249 = vmax.xlane.f32.xlu0 %v1248
        %v1250 = vpop.xlane.xlu0 %1249
        %v1251 = vsel %vm1244, %v1193, -inf
        %1252 = vmax.xlane.f32.xlu0 %v1251
        %v1253 = vpop.xlane.xlu0 %1252
        %v1254 = vsel %vm1244, %v1239, -inf
        %1255 = vmax.xlane.f32.xlu0 %v1254
        %v1256 = vpop.xlane.xlu0 %1255
        %v1257 = vsub.f32 %v1101, %v1247
        %v1258 = vsub.f32 %v1147, %v1250
        %v1259 = vsub.f32 %v1193, %v1253
        %v1260 = vsub.f32 %v1239, %v1256
        %v1261 = vmul.f32 %v1257, 1.442695
        %v1262 = vpow.pop %v1261
        %v1263 = vmul.f32 %v1258, 1.442695
        %v1264 = vpow.pop %v1263
        %v1265 = vmul.f32 %v1259, 1.442695
        %v1266 = vpow.pop %v1265
        %v1267 = vmul.f32 %v1260, 1.442695
        %v1268 = vpow.pop %v1267
        %v1269 = vsel %vm1244, %v1262, 0.0
        %1270 = vadd.xlane.f32.xlu0 %v1269
        %v1271 = vpop.xlane.xlu0 %1270
        %v1272 = vsel %vm1244, %v1264, 0.0
        %1273 = vadd.xlane.f32.xlu0 %v1272
        %v1274 = vpop.xlane.xlu0 %1273
        %v1275 = vsel %vm1244, %v1266, 0.0
        %1276 = vadd.xlane.f32.xlu0 %v1275
        %v1277 = vpop.xlane.xlu0 %1276
        %v1278 = vsel %vm1244, %v1268, 0.0
        %1279 = vadd.xlane.f32.xlu0 %v1278
        %v1280 = vpop.xlane.xlu0 %1279
        %v1281 = vrcp.pop %v1271
        %v1282 = vrcp.pop %v1274
        %v1283 = vrcp.pop %v1277
        %v1284 = vrcp.pop %v1280
        %v1285 = vmul.f32 %v1262, %v1281
        %v1286 = vmul.f32 %v1264, %v1282
        %v1287 = vmul.f32 %v1266, %v1283
        %v1288 = vmul.f32 %v1268, %v1284
        %v1289 = vpack.c.bf16 %v1285, %v1285
        %v1290 = vpack.c.bf16 %v1286, %v1286
        %v1291 = vpack.c.bf16 %v1287, %v1287
        %v1292 = vpack.c.bf16 %v1288, %v1288
        %v1293 = vpack.c.bf16 %v1047, %v1047
        %v1294 = vpack.c.bf16 %v1048, %v1048
        %v1295 = vpack.c.bf16 %v1049, %v1049
        %v1296 = vpack.c.bf16 %v1050, %v1050
        %v1298 = vsel %vm1244, %v1289, 0
        %vm1300 = vcmask 1043456
        %v1302 = vsel %vm1300, %v1293, 0
        %1304 = vmatprep.subr.bf16.mxu0 0
        %1305 = vmatpush1.bf16.msra.mxu0 0
        %1306 = vmatprep.subr.bf16.mxu0 0
        %1307 = vmatpush1.bf16.msra.mxu0 0
        %1308 = vmatprep.subr.bf16.mxu0 0
        %1309 = vmatpush1.bf16.msra.mxu0 0
        %1310 = vmatprep.subr.bf16.mxu0 0
        %1311 = vmatpush1.bf16.msra.mxu0 0
        %1312 = vmatprep.subr.bf16.mxu0 0
        %1313 = vmatpush1.bf16.msra.mxu0 0
        %1314 = vmatprep.subr.bf16.mxu0 0
        %1315 = vmatpush1.bf16.msra.mxu0 0
        %1316 = vmatprep.subr.bf16.mxu0 0
        %1317 = vmatpush1.bf16.msra.mxu0 0
        %1318 = vmatprep.subr.bf16.mxu0 0
        %1319 = vmatpush1.bf16.msra.mxu0 %v1302
        %1320 = vmatprep.subr.bf16.mxu0 0
        %1321 = vmatpush2.bf16.msra.mxu0 0
        %1322 = vmatprep.subr.bf16.mxu0 0
        %1323 = vmatpush2.bf16.msra.mxu0 0
        %1324 = vmatprep.subr.bf16.mxu0 0
        %1325 = vmatpush2.bf16.msra.mxu0 0
        %1326 = vmatprep.subr.bf16.mxu0 0
        %1327 = vmatpush2.bf16.msra.mxu0 0
        %1328 = vmatprep.subr.bf16.mxu0 0
        %1329 = vmatpush2.bf16.msra.mxu0 0
        %1330 = vmatprep.subr.bf16.mxu0 0
        %1331 = vmatpush2.bf16.msra.mxu0 0
        %1332 = vmatprep.subr.bf16.mxu0 0
        %1333 = vmatpush2.bf16.msra.mxu0 0
        %1334 = vmatprep.subr.bf16.mxu0 0
        %1335 = vmatpush2.bf16.msra.mxu0 0
        %1336 = vmatprep.mubr.bf16.mxu0 0
        %1337 = vmatmul.mubr.bf16.gmra.mxu0 %v1298
        %v1338 = vpop.f32.mrf.mxu0
        %v1339 = vadd.f32 0.0, %v1338
        %v1340 = vpop.f32.mrf.mxu0
        %v1341 = vpop.f32.mrf.mxu0
        %v1342 = vpop.f32.mrf.mxu0
        %1343 = vdwg.mxu0
        %v1345 = vsel %vm1244, %v1290, 0
        %v1348 = vsel %vm1300, %v1294, 0
        %1350 = vmatprep.subr.bf16.mxu0 0
        %1351 = vmatpush1.bf16.msra.mxu0 0
        %1352 = vmatprep.subr.bf16.mxu0 0
        %1353 = vmatpush1.bf16.msra.mxu0 0
        %1354 = vmatprep.subr.bf16.mxu0 0
        %1355 = vmatpush1.bf16.msra.mxu0 0
        %1356 = vmatprep.subr.bf16.mxu0 0
        %1357 = vmatpush1.bf16.msra.mxu0 0
        %1358 = vmatprep.subr.bf16.mxu0 0
        %1359 = vmatpush1.bf16.msra.mxu0 0
        %1360 = vmatprep.subr.bf16.mxu0 0
        %1361 = vmatpush1.bf16.msra.mxu0 0
        %1362 = vmatprep.subr.bf16.mxu0 0
        %1363 = vmatpush1.bf16.msra.mxu0 0
        %1364 = vmatprep.subr.bf16.mxu0 0
        %1365 = vmatpush1.bf16.msra.mxu0 %v1348
        %1366 = vmatprep.subr.bf16.mxu0 0
        %1367 = vmatpush2.bf16.msra.mxu0 0
        %1368 = vmatprep.subr.bf16.mxu0 0
        %1369 = vmatpush2.bf16.msra.mxu0 0
        %1370 = vmatprep.subr.bf16.mxu0 0
        %1371 = vmatpush2.bf16.msra.mxu0 0
        %1372 = vmatprep.subr.bf16.mxu0 0
        %1373 = vmatpush2.bf16.msra.mxu0 0
        %1374 = vmatprep.subr.bf16.mxu0 0
        %1375 = vmatpush2.bf16.msra.mxu0 0
        %1376 = vmatprep.subr.bf16.mxu0 0
        %1377 = vmatpush2.bf16.msra.mxu0 0
        %1378 = vmatprep.subr.bf16.mxu0 0
        %1379 = vmatpush2.bf16.msra.mxu0 0
        %1380 = vmatprep.subr.bf16.mxu0 0
        %1381 = vmatpush2.bf16.msra.mxu0 0
        %1382 = vmatprep.mubr.bf16.mxu0 0
        %1383 = vmatmul.mubr.bf16.gmra.mxu0 %v1345
        %v1384 = vpop.f32.mrf.mxu0
        %v1385 = vadd.f32 0.0, %v1384
        %v1386 = vpop.f32.mrf.mxu0
        %v1387 = vpop.f32.mrf.mxu0
        %v1388 = vpop.f32.mrf.mxu0
        %1389 = vdwg.mxu0
        %v1391 = vsel %vm1244, %v1291, 0
        %v1394 = vsel %vm1300, %v1295, 0
        %1396 = vmatprep.subr.bf16.mxu0 0
        %1397 = vmatpush1.bf16.msra.mxu0 0
        %1398 = vmatprep.subr.bf16.mxu0 0
        %1399 = vmatpush1.bf16.msra.mxu0 0
        %1400 = vmatprep.subr.bf16.mxu0 0
        %1401 = vmatpush1.bf16.msra.mxu0 0
        %1402 = vmatprep.subr.bf16.mxu0 0
        %1403 = vmatpush1.bf16.msra.mxu0 0
        %1404 = vmatprep.subr.bf16.mxu0 0
        %1405 = vmatpush1.bf16.msra.mxu0 0
        %1406 = vmatprep.subr.bf16.mxu0 0
        %1407 = vmatpush1.bf16.msra.mxu0 0
        %1408 = vmatprep.subr.bf16.mxu0 0
        %1409 = vmatpush1.bf16.msra.mxu0 0
        %1410 = vmatprep.subr.bf16.mxu0 0
        %1411 = vmatpush1.bf16.msra.mxu0 %v1394
        %1412 = vmatprep.subr.bf16.mxu0 0
        %1413 = vmatpush2.bf16.msra.mxu0 0
        %1414 = vmatprep.subr.bf16.mxu0 0
        %1415 = vmatpush2.bf16.msra.mxu0 0
        %1416 = vmatprep.subr.bf16.mxu0 0
        %1417 = vmatpush2.bf16.msra.mxu0 0
        %1418 = vmatprep.subr.bf16.mxu0 0
        %1419 = vmatpush2.bf16.msra.mxu0 0
        %1420 = vmatprep.subr.bf16.mxu0 0
        %1421 = vmatpush2.bf16.msra.mxu0 0
        %1422 = vmatprep.subr.bf16.mxu0 0
        %1423 = vmatpush2.bf16.msra.mxu0 0
        %1424 = vmatprep.subr.bf16.mxu0 0
        %1425 = vmatpush2.bf16.msra.mxu0 0
        %1426 = vmatprep.subr.bf16.mxu0 0
        %1427 = vmatpush2.bf16.msra.mxu0 0
        %1428 = vmatprep.mubr.bf16.mxu0 0
        %1429 = vmatmul.mubr.bf16.gmra.mxu0 %v1391
        %v1430 = vpop.f32.mrf.mxu0
        %v1431 = vadd.f32 0.0, %v1430
        %v1432 = vpop.f32.mrf.mxu0
        %v1433 = vpop.f32.mrf.mxu0
        %v1434 = vpop.f32.mrf.mxu0
        %1435 = vdwg.mxu0
        %v1437 = vsel %vm1244, %v1292, 0
        %v1440 = vsel %vm1300, %v1296, 0
        %1442 = vmatprep.subr.bf16.mxu0 0
        %1443 = vmatpush1.bf16.msra.mxu0 0
        %1444 = vmatprep.subr.bf16.mxu0 0
        %1445 = vmatpush1.bf16.msra.mxu0 0
        %1446 = vmatprep.subr.bf16.mxu0 0
        %1447 = vmatpush1.bf16.msra.mxu0 0
        %1448 = vmatprep.subr.bf16.mxu0 0
        %1449 = vmatpush1.bf16.msra.mxu0 0
        %1450 = vmatprep.subr.bf16.mxu0 0
        %1451 = vmatpush1.bf16.msra.mxu0 0
        %1452 = vmatprep.subr.bf16.mxu0 0
        %1453 = vmatpush1.bf16.msra.mxu0 0
        %1454 = vmatprep.subr.bf16.mxu0 0
        %1455 = vmatpush1.bf16.msra.mxu0 0
        %1456 = vmatprep.subr.bf16.mxu0 0
        %1457 = vmatpush1.bf16.msra.mxu0 %v1440
        %1458 = vmatprep.subr.bf16.mxu0 0
        %1459 = vmatpush2.bf16.msra.mxu0 0
        %1460 = vmatprep.subr.bf16.mxu0 0
        %1461 = vmatpush2.bf16.msra.mxu0 0
        %1462 = vmatprep.subr.bf16.mxu0 0
        %1463 = vmatpush2.bf16.msra.mxu0 0
        %1464 = vmatprep.subr.bf16.mxu0 0
        %1465 = vmatpush2.bf16.msra.mxu0 0
        %1466 = vmatprep.subr.bf16.mxu0 0
        %1467 = vmatpush2.bf16.msra.mxu0 0
        %1468 = vmatprep.subr.bf16.mxu0 0
        %1469 = vmatpush2.bf16.msra.mxu0 0
        %1470 = vmatprep.subr.bf16.mxu0 0
        %1471 = vmatpush2.bf16.msra.mxu0 0
        %1472 = vmatprep.subr.bf16.mxu0 0
        %1473 = vmatpush2.bf16.msra.mxu0 0
        %1474 = vmatprep.mubr.bf16.mxu0 0
        %1475 = vmatmul.mubr.bf16.gmra.mxu0 %v1437
        %v1476 = vpop.f32.mrf.mxu0
        %v1477 = vadd.f32 0.0, %v1476
        %v1478 = vpop.f32.mrf.mxu0
        %v1479 = vpop.f32.mrf.mxu0
        %v1480 = vpop.f32.mrf.mxu0
        %1481 = vdwg.mxu0
        %v1482 = vcombine.low %v1339, %v1431
        %v1483 = vcombine.high %v1339, %v1431
        %v1485 = vunpack.c.l.s4 1983009808
        %v1486 = vunpack.c.0.s8 %v1485
        %v1487 = vlaneseq
        %v1488 = vshrl.u32 %v1487, 7
        %v1489 = vsub.s32 %v1486, %v1488
        %v1490 = vrot.slane %v1482, %v1489
        %v1492 = vunpack.c.l.s4 1983009808
        %v1493 = vunpack.c.0.s8 %v1492
        %v1494 = vlaneseq
        %v1495 = vshrl.u32 %v1494, 7
        %v1496 = vsub.s32 %v1493, %v1495
        %v1497 = vrot.slane %v1483, %v1496
        %v1498 = vcombine.low %v1385, %v1477
        %v1499 = vcombine.high %v1385, %v1477
        %v1501 = vunpack.c.l.s4 1983009808
        %v1502 = vunpack.c.0.s8 %v1501
        %v1503 = vlaneseq
        %v1504 = vshrl.u32 %v1503, 7
        %v1505 = vsub.s32 %v1502, %v1504
        %v1506 = vrot.slane %v1498, %v1505
        %v1508 = vunpack.c.l.s4 1983009808
        %v1509 = vunpack.c.0.s8 %v1508
        %v1510 = vlaneseq
        %v1511 = vshrl.u32 %v1510, 7
        %v1512 = vsub.s32 %v1509, %v1511
        %v1513 = vrot.slane %v1499, %v1512
        %v1514 = vcombine.low %v1490, %v1506
        %v1515 = vcombine.high %v1490, %v1506
        %v1517 = vunpack.c.l.s4 1934713408
        %v1518 = vunpack.c.0.s8 %v1517
        %v1519 = vlaneseq
        %v1520 = vshrl.u32 %v1519, 7
        %v1521 = vsub.s32 %v1518, %v1520
        %v1522 = vrot.slane %v1514, %v1521
        %v1524 = vunpack.c.l.s4 1934713408
        %v1525 = vunpack.c.0.s8 %v1524
        %v1526 = vlaneseq
        %v1527 = vshrl.u32 %v1526, 7
        %v1528 = vsub.s32 %v1525, %v1527
        %v1529 = vrot.slane %v1515, %v1528
        %v1530 = vcombine.low %v1497, %v1513
        %v1531 = vcombine.high %v1497, %v1513
        %v1533 = vunpack.c.l.s4 1934713408
        %v1534 = vunpack.c.0.s8 %v1533
        %v1535 = vlaneseq
        %v1536 = vshrl.u32 %v1535, 7
        %v1537 = vsub.s32 %v1534, %v1536
        %v1538 = vrot.slane %v1530, %v1537
        %v1540 = vunpack.c.l.s4 1934713408
        %v1541 = vunpack.c.0.s8 %v1540
        %v1542 = vlaneseq
        %v1543 = vshrl.u32 %v1542, 7
        %v1544 = vsub.s32 %v1541, %v1543
        %v1545 = vrot.slane %v1531, %v1544
        %v1546 = vcombine.high %v1522, 0.0
        %v1547 = vcombine.high %v1529, 0.0
        %v1548 = vcombine.high %v1538, 0.0
        %v1549 = vcombine.high %v1545, 0.0
        %v1550 = vcombine.low %v1522, %v1529
        %v1552 = vunpack.c.l.s4 1983009808
        %v1553 = vunpack.c.0.s8 %v1552
        %v1554 = vlaneseq
        %v1555 = vshrl.u32 %v1554, 7
        %v1556 = vsub.s32 %v1553, %v1555
        %v1557 = vrot.slane %v1550, %v1556
        %v1558 = vcombine.low %v1546, %v1547
        %v1560 = vunpack.c.l.s4 1983009808
        %v1561 = vunpack.c.0.s8 %v1560
        %v1562 = vlaneseq
        %v1563 = vshrl.u32 %v1562, 7
        %v1564 = vsub.s32 %v1561, %v1563
        %v1565 = vrot.slane %v1558, %v1564
        %v1566 = vcombine.low %v1538, %v1545
        %v1568 = vunpack.c.l.s4 1983009808
        %v1569 = vunpack.c.0.s8 %v1568
        %v1570 = vlaneseq
        %v1571 = vshrl.u32 %v1570, 7
        %v1572 = vsub.s32 %v1569, %v1571
        %v1573 = vrot.slane %v1566, %v1572
        %v1574 = vcombine.low %v1548, %v1549
        %v1576 = vunpack.c.l.s4 1983009808
        %v1577 = vunpack.c.0.s8 %v1576
        %v1578 = vlaneseq
        %v1579 = vshrl.u32 %v1578, 7
        %v1580 = vsub.s32 %v1577, %v1579
        %v1581 = vrot.slane %v1574, %v1580
        %v1582 = vcombine.low %v1557, %v1565
        %v1583 = vcombine.high %v1557, %v1565
        %v1585 = vunpack.c.l.s4 1934713408
        %v1586 = vunpack.c.0.s8 %v1585
        %v1587 = vlaneseq
        %v1588 = vshrl.u32 %v1587, 7
        %v1589 = vsub.s32 %v1586, %v1588
        %v1590 = vrot.slane %v1582, %v1589
        %v1592 = vunpack.c.l.s4 1934713408
        %v1593 = vunpack.c.0.s8 %v1592
        %v1594 = vlaneseq
        %v1595 = vshrl.u32 %v1594, 7
        %v1596 = vsub.s32 %v1593, %v1595
        %v1597 = vrot.slane %v1583, %v1596
        %v1598 = vcombine.low %v1573, %v1581
        %v1599 = vcombine.high %v1573, %v1581
        %v1601 = vunpack.c.l.s4 1934713408
        %v1602 = vunpack.c.0.s8 %v1601
        %v1603 = vlaneseq
        %v1604 = vshrl.u32 %v1603, 7
        %v1605 = vsub.s32 %v1602, %v1604
        %v1606 = vrot.slane %v1598, %v1605
        %v1608 = vunpack.c.l.s4 1934713408
        %v1609 = vunpack.c.0.s8 %v1608
        %v1610 = vlaneseq
        %v1611 = vshrl.u32 %v1610, 7
        %v1612 = vsub.s32 %v1609, %v1611
        %v1613 = vrot.slane %v1599, %v1612
        %v1614 = vcombine.low %v1590, %v1606
        %v1615 = vcombine.high %v1590, %v1606
        %v1616 = vcombine.low %v1597, %v1613
        %v1617 = vcombine.high %v1597, %v1613
        %1619 = vrot.lane.b32.xlu0 %v1615, 32
        %v1620 = vpop.permute.xlu0 %1619
        %1623 = vrot.lane.b32.xlu0 %v1616, 64
        %v1624 = vpop.permute.xlu0 %1623
        %1627 = vrot.lane.b32.xlu0 %v1617, 96
        %v1628 = vpop.permute.xlu0 %1627
        %v1630 = vsel %vm1059, %v1614, %v1620
        %vm1631 = vcmask 523264
        %v1632 = vsel %vm1631, %v1630, %v1624
        %vm1633 = vcmask 785408
        %v1634 = vsel %vm1633, %v1632, %v1628
        %v1635 = vpack.c.bf16 %v1634, %v1634
        %v1636 = vld [vmem:[#allocation7] sm:$0xf]
        %v1637 = vld [vmem:[#allocation7 + $0x4] sm:$0xf]
        %v1638 = vld [vmem:[#allocation7 + $0x8] sm:$0xf]
        %v1639 = vld [vmem:[#allocation7 + $0xc] sm:$0xf]
        %v1640 = vld [vmem:[#allocation7 + $0x10] sm:$0xf]
        %v1641 = vld [vmem:[#allocation7 + $0x14] sm:$0xf]
        %v1642 = vld [vmem:[#allocation7 + $0x18] sm:$0xf]
        %v1643 = vld [vmem:[#allocation7 + $0x1c] sm:$0xf]
        %v1644 = vld [vmem:[#allocation7 + $0x20] sm:$0xf]
        %v1645 = vld [vmem:[#allocation7 + $0x24] sm:$0xf]
        %v1646 = vld [vmem:[#allocation7 + $0x28] sm:$0xf]
        %v1647 = vld [vmem:[#allocation7 + $0x2c] sm:$0xf]
        %v1648 = vld [vmem:[#allocation7 + $0x30] sm:$0xf]
        %v1649 = vld [vmem:[#allocation7 + $0x34] sm:$0xf]
        %v1650 = vld [vmem:[#allocation7 + $0x38] sm:$0xf]
        %v1651 = vld [vmem:[#allocation7 + $0x3c] sm:$0xf]
        %v1668 = vunpack.c.l.b16 %v1636
        %v1669 = vunpack.c.l.b16 %v1637
        %v1670 = vunpack.c.l.b16 %v1638
        %v1671 = vunpack.c.l.b16 %v1639
        %v1672 = vunpack.c.l.b16 %v1640
        %v1673 = vunpack.c.l.b16 %v1641
        %v1674 = vunpack.c.l.b16 %v1642
        %v1675 = vunpack.c.l.b16 %v1643
        %v1676 = vunpack.c.l.b16 %v1644
        %v1677 = vunpack.c.l.b16 %v1645
        %v1678 = vunpack.c.l.b16 %v1646
        %v1679 = vunpack.c.l.b16 %v1647
        %v1680 = vunpack.c.l.b16 %v1648
        %v1681 = vunpack.c.l.b16 %v1649
        %v1682 = vunpack.c.l.b16 %v1650
        %v1683 = vunpack.c.l.b16 %v1651
        %v1684 = vpack.c.b16 %v1669, %v1668
        %v1685 = vpack.c.b16 %v1671, %v1670
        %v1686 = vpack.c.b16 %v1673, %v1672
        %v1687 = vpack.c.b16 %v1675, %v1674
        %v1688 = vpack.c.b16 %v1677, %v1676
        %v1689 = vpack.c.b16 %v1679, %v1678
        %v1690 = vpack.c.b16 %v1681, %v1680
        %v1691 = vpack.c.b16 %v1683, %v1682
        %1700 = vmatprep.subr.bf16.mxu0 0
        %1701 = vmatpush1.bf16.msra.mxu0 %v1691
        %1702 = vmatprep.subr.bf16.mxu0 0
        %1703 = vmatpush1.bf16.msra.mxu0 %v1690
        %1704 = vmatprep.subr.bf16.mxu0 0
        %1705 = vmatpush1.bf16.msra.mxu0 %v1689
        %1706 = vmatprep.subr.bf16.mxu0 0
        %1707 = vmatpush1.bf16.msra.mxu0 %v1688
        %1708 = vmatprep.subr.bf16.mxu0 0
        %1709 = vmatpush1.bf16.msra.mxu0 %v1687
        %1710 = vmatprep.subr.bf16.mxu0 0
        %1711 = vmatpush1.bf16.msra.mxu0 %v1686
        %1712 = vmatprep.subr.bf16.mxu0 0
        %1713 = vmatpush1.bf16.msra.mxu0 %v1685
        %1714 = vmatprep.subr.bf16.mxu0 0
        %1715 = vmatpush1.bf16.msra.mxu0 %v1684
        %1716 = vmatprep.subr.bf16.mxu0 0
        %1717 = vmatpush2.bf16.msra.mxu0 0
        %1718 = vmatprep.subr.bf16.mxu0 0
        %1719 = vmatpush2.bf16.msra.mxu0 0
        %1720 = vmatprep.subr.bf16.mxu0 0
        %1721 = vmatpush2.bf16.msra.mxu0 0
        %1722 = vmatprep.subr.bf16.mxu0 0
        %1723 = vmatpush2.bf16.msra.mxu0 0
        %1724 = vmatprep.subr.bf16.mxu0 0
        %1725 = vmatpush2.bf16.msra.mxu0 0
        %1726 = vmatprep.subr.bf16.mxu0 0
        %1727 = vmatpush2.bf16.msra.mxu0 0
        %1728 = vmatprep.subr.bf16.mxu0 0
        %1729 = vmatpush2.bf16.msra.mxu0 0
        %1730 = vmatprep.subr.bf16.mxu0 0
        %1731 = vmatpush2.bf16.msra.mxu0 0
        %1732 = vmatprep.mubr.bf16.mxu0 0
        %1733 = vmatmul.mubr.bf16.gmra.mxu0 %v1635
        %v1734 = vpop.f32.mrf.mxu0
        %v1735 = vadd.f32 0.0, %v1734
        %v1736 = vpop.f32.mrf.mxu0
        %v1737 = vpop.f32.mrf.mxu0
        %v1738 = vpop.f32.mrf.mxu0
        %1739 = vdwg.mxu0
        %v1740 = vadd.f32 %v353, %v1735
        %v1741 = vmul.f32 %v1740, %v1740
        %1742 = vadd.xlane.f32.xlu0 %v1741
        %v1743 = vpop.xlane.xlu0 %1742
        %v1744 = vmul.f32 %v1743, %v357
        %v1745 = vadd.f32 %v1744, 1e-06
        %v1746 = vrsqrt.pop %v1745
        %v1747 = vmul.f32 %v1740, %v1746
        %v1748 = vld [vmem:[%s4] sm:$0x1]
        %v1750 = vlaneseq
        %v1751 = vshrl.u32 %v1750, 7
        %v1752 = vsub.s32 0, %v1751
        %v1753 = vrot.slane %v1748, %v1752
        %v1755 = vmul.f32 %v1747, %v1753
        %v1756 = vpack.c.bf16 %v1755, %v1755
        %v1757 = vld [vmem:[#allocation8] sm:$0xff]
        %v1758 = vld [vmem:[#allocation8 + $0x8] sm:$0xff]
        %v1759 = vld [vmem:[#allocation8 + $0x10] sm:$0xff]
        %v1760 = vld [vmem:[#allocation8 + $0x18] sm:$0xff]
        %v1761 = vld [vmem:[#allocation8 + $0x20] sm:$0xff]
        %v1762 = vld [vmem:[#allocation8 + $0x28] sm:$0xff]
        %v1763 = vld [vmem:[#allocation8 + $0x30] sm:$0xff]
        %v1764 = vld [vmem:[#allocation8 + $0x38] sm:$0xff]
        %v1765 = vld [vmem:[#allocation8 + $0x40] sm:$0xff]
        %v1766 = vld [vmem:[#allocation8 + $0x48] sm:$0xff]
        %v1767 = vld [vmem:[#allocation8 + $0x50] sm:$0xff]
        %v1768 = vld [vmem:[#allocation8 + $0x58] sm:$0xff]
        %v1769 = vld [vmem:[#allocation8 + $0x60] sm:$0xff]
        %v1770 = vld [vmem:[#allocation8 + $0x68] sm:$0xff]
        %v1771 = vld [vmem:[#allocation8 + $0x70] sm:$0xff]
        %v1772 = vld [vmem:[#allocation8 + $0x78] sm:$0xff]
        %v1773 = vld [vmem:[#allocation8 + $0x80] sm:$0xff]
        %v1774 = vld [vmem:[#allocation8 + $0x88] sm:$0xff]
        %v1775 = vld [vmem:[#allocation8 + $0x90] sm:$0xff]
        %v1776 = vld [vmem:[#allocation8 + $0x98] sm:$0xff]
        %v1777 = vld [vmem:[#allocation8 + $0xa0] sm:$0xff]
        %v1778 = vld [vmem:[#allocation8 + $0xa8] sm:$0xff]
        %v1779 = vld [vmem:[#allocation8 + $0xb0] sm:$0xff]
        %v1780 = vld [vmem:[#allocation8 + $0xb8] sm:$0xff]
        %v1781 = vld [vmem:[#allocation8 + $0xc0] sm:$0xff]
        %v1782 = vld [vmem:[#allocation8 + $0xc8] sm:$0xff]
        %v1783 = vld [vmem:[#allocation8 + $0xd0] sm:$0xff]
        %v1784 = vld [vmem:[#allocation8 + $0xd8] sm:$0xff]
        %v1785 = vld [vmem:[#allocation8 + $0xe0] sm:$0xff]
        %v1786 = vld [vmem:[#allocation8 + $0xe8] sm:$0xff]
        %v1787 = vld [vmem:[#allocation8 + $0xf0] sm:$0xff]
        %v1788 = vld [vmem:[#allocation8 + $0xf8] sm:$0xff]
        %v1821 = vunpack.c.l.b16 %v1757
        %v1822 = vunpack.c.h.b16 %v1757
        %v1823 = vunpack.c.l.b16 %v1758
        %v1824 = vunpack.c.h.b16 %v1758
        %v1825 = vunpack.c.l.b16 %v1759
        %v1826 = vunpack.c.h.b16 %v1759
        %v1827 = vunpack.c.l.b16 %v1760
        %v1828 = vunpack.c.h.b16 %v1760
        %v1829 = vunpack.c.l.b16 %v1761
        %v1830 = vunpack.c.h.b16 %v1761
        %v1831 = vunpack.c.l.b16 %v1762
        %v1832 = vunpack.c.h.b16 %v1762
        %v1833 = vunpack.c.l.b16 %v1763
        %v1834 = vunpack.c.h.b16 %v1763
        %v1835 = vunpack.c.l.b16 %v1764
        %v1836 = vunpack.c.h.b16 %v1764
        %v1837 = vunpack.c.l.b16 %v1765
        %v1838 = vunpack.c.h.b16 %v1765
        %v1839 = vunpack.c.l.b16 %v1766
        %v1840 = vunpack.c.h.b16 %v1766
        %v1841 = vunpack.c.l.b16 %v1767
        %v1842 = vunpack.c.h.b16 %v1767
        %v1843 = vunpack.c.l.b16 %v1768
        %v1844 = vunpack.c.h.b16 %v1768
        %v1845 = vunpack.c.l.b16 %v1769
        %v1846 = vunpack.c.h.b16 %v1769
        %v1847 = vunpack.c.l.b16 %v1770
        %v1848 = vunpack.c.h.b16 %v1770
        %v1849 = vunpack.c.l.b16 %v1771
        %v1850 = vunpack.c.h.b16 %v1771
        %v1851 = vunpack.c.l.b16 %v1772
        %v1852 = vunpack.c.h.b16 %v1772
        %v1853 = vunpack.c.l.b16 %v1773
        %v1854 = vunpack.c.h.b16 %v1773
        %v1855 = vunpack.c.l.b16 %v1774
        %v1856 = vunpack.c.h.b16 %v1774
        %v1857 = vunpack.c.l.b16 %v1775
        %v1858 = vunpack.c.h.b16 %v1775
        %v1859 = vunpack.c.l.b16 %v1776
        %v1860 = vunpack.c.h.b16 %v1776
        %v1861 = vunpack.c.l.b16 %v1777
        %v1862 = vunpack.c.h.b16 %v1777
        %v1863 = vunpack.c.l.b16 %v1778
        %v1864 = vunpack.c.h.b16 %v1778
        %v1865 = vunpack.c.l.b16 %v1779
        %v1866 = vunpack.c.h.b16 %v1779
        %v1867 = vunpack.c.l.b16 %v1780
        %v1868 = vunpack.c.h.b16 %v1780
        %v1869 = vunpack.c.l.b16 %v1781
        %v1870 = vunpack.c.h.b16 %v1781
        %v1871 = vunpack.c.l.b16 %v1782
        %v1872 = vunpack.c.h.b16 %v1782
        %v1873 = vunpack.c.l.b16 %v1783
        %v1874 = vunpack.c.h.b16 %v1783
        %v1875 = vunpack.c.l.b16 %v1784
        %v1876 = vunpack.c.h.b16 %v1784
        %v1877 = vunpack.c.l.b16 %v1785
        %v1878 = vunpack.c.h.b16 %v1785
        %v1879 = vunpack.c.l.b16 %v1786
        %v1880 = vunpack.c.h.b16 %v1786
        %v1881 = vunpack.c.l.b16 %v1787
        %v1882 = vunpack.c.h.b16 %v1787
        %v1883 = vunpack.c.l.b16 %v1788
        %v1884 = vunpack.c.h.b16 %v1788
        %v1885 = vpack.c.b16 %v1825, %v1821
        %v1886 = vpack.c.b16 %v1826, %v1822
        %v1887 = vpack.c.b16 %v1827, %v1823
        %v1888 = vpack.c.b16 %v1828, %v1824
        %v1889 = vpack.c.b16 %v1833, %v1829
        %v1890 = vpack.c.b16 %v1834, %v1830
        %v1891 = vpack.c.b16 %v1835, %v1831
        %v1892 = vpack.c.b16 %v1836, %v1832
        %v1893 = vpack.c.b16 %v1841, %v1837
        %v1894 = vpack.c.b16 %v1842, %v1838
        %v1895 = vpack.c.b16 %v1843, %v1839
        %v1896 = vpack.c.b16 %v1844, %v1840
        %v1897 = vpack.c.b16 %v1849, %v1845
        %v1898 = vpack.c.b16 %v1850, %v1846
        %v1899 = vpack.c.b16 %v1851, %v1847
        %v1900 = vpack.c.b16 %v1852, %v1848
        %v1901 = vpack.c.b16 %v1857, %v1853
        %v1902 = vpack.c.b16 %v1858, %v1854
        %v1903 = vpack.c.b16 %v1859, %v1855
        %v1904 = vpack.c.b16 %v1860, %v1856
        %v1905 = vpack.c.b16 %v1865, %v1861
        %v1906 = vpack.c.b16 %v1866, %v1862
        %v1907 = vpack.c.b16 %v1867, %v1863
        %v1908 = vpack.c.b16 %v1868, %v1864
        %v1909 = vpack.c.b16 %v1873, %v1869
        %v1910 = vpack.c.b16 %v1874, %v1870
        %v1911 = vpack.c.b16 %v1875, %v1871
        %v1912 = vpack.c.b16 %v1876, %v1872
        %v1913 = vpack.c.b16 %v1881, %v1877
        %v1914 = vpack.c.b16 %v1882, %v1878
        %v1915 = vpack.c.b16 %v1883, %v1879
        %v1916 = vpack.c.b16 %v1884, %v1880
        %1949 = vmatprep.subr.bf16.mxu0 %v1914
        %1950 = vmatpush1.bf16.msra.mxu0 %v1913
        %1951 = vmatprep.subr.bf16.mxu0 %v1910
        %1952 = vmatpush1.bf16.msra.mxu0 %v1909
        %1953 = vmatprep.subr.bf16.mxu0 %v1906
        %1954 = vmatpush1.bf16.msra.mxu0 %v1905
        %1955 = vmatprep.subr.bf16.mxu0 %v1902
        %1956 = vmatpush1.bf16.msra.mxu0 %v1901
        %1957 = vmatprep.subr.bf16.mxu0 %v1898
        %1958 = vmatpush1.bf16.msra.mxu0 %v1897
        %1959 = vmatprep.subr.bf16.mxu0 %v1894
        %1960 = vmatpush1.bf16.msra.mxu0 %v1893
        %1961 = vmatprep.subr.bf16.mxu0 %v1890
        %1962 = vmatpush1.bf16.msra.mxu0 %v1889
        %1963 = vmatprep.subr.bf16.mxu0 %v1886
        %1964 = vmatpush1.bf16.msra.mxu0 %v1885
        %1965 = vmatprep.subr.bf16.mxu0 0
        %1966 = vmatpush2.bf16.msra.mxu0 0
        %1967 = vmatprep.subr.bf16.mxu0 0
        %1968 = vmatpush2.bf16.msra.mxu0 0
        %1969 = vmatprep.subr.bf16.mxu0 0
        %1970 = vmatpush2.bf16.msra.mxu0 0
        %1971 = vmatprep.subr.bf16.mxu0 0
        %1972 = vmatpush2.bf16.msra.mxu0 0
        %1973 = vmatprep.subr.bf16.mxu0 0
        %1974 = vmatpush2.bf16.msra.mxu0 0
        %1975 = vmatprep.subr.bf16.mxu0 0
        %1976 = vmatpush2.bf16.msra.mxu0 0
        %1977 = vmatprep.subr.bf16.mxu0 0
        %1978 = vmatpush2.bf16.msra.mxu0 0
        %1979 = vmatprep.subr.bf16.mxu0 0
        %1980 = vmatpush2.bf16.msra.mxu0 0
        %1981 = vmatprep.mubr.bf16.mxu0 0
        %1982 = vmatmul.mubr.bf16.gmra.mxu0 %v1756
        %v1983 = vpop.f32.mrf.mxu0
        %v1984 = vadd.f32 0.0, %v1983
        %v1985 = vpop.f32.mrf.mxu0
        %v1986 = vadd.f32 0.0, %v1985
        %v1987 = vpop.f32.mrf.mxu0
        %v1988 = vpop.f32.mrf.mxu0
        %1989 = vdwg.mxu0
        %1990 = vmatprep.subr.bf16.mxu0 %v1916
        %1991 = vmatpush1.bf16.msra.mxu0 %v1915
        %1992 = vmatprep.subr.bf16.mxu0 %v1912
        %1993 = vmatpush1.bf16.msra.mxu0 %v1911
        %1994 = vmatprep.subr.bf16.mxu0 %v1908
        %1995 = vmatpush1.bf16.msra.mxu0 %v1907
        %1996 = vmatprep.subr.bf16.mxu0 %v1904
        %1997 = vmatpush1.bf16.msra.mxu0 %v1903
        %1998 = vmatprep.subr.bf16.mxu0 %v1900
        %1999 = vmatpush1.bf16.msra.mxu0 %v1899
        %2000 = vmatprep.subr.bf16.mxu0 %v1896
        %2001 = vmatpush1.bf16.msra.mxu0 %v1895
        %2002 = vmatprep.subr.bf16.mxu0 %v1892
        %2003 = vmatpush1.bf16.msra.mxu0 %v1891
        %2004 = vmatprep.subr.bf16.mxu0 %v1888
        %2005 = vmatpush1.bf16.msra.mxu0 %v1887
        %2006 = vmatprep.subr.bf16.mxu0 0
        %2007 = vmatpush2.bf16.msra.mxu0 0
        %2008 = vmatprep.subr.bf16.mxu0 0
        %2009 = vmatpush2.bf16.msra.mxu0 0
        %2010 = vmatprep.subr.bf16.mxu0 0
        %2011 = vmatpush2.bf16.msra.mxu0 0
        %2012 = vmatprep.subr.bf16.mxu0 0
        %2013 = vmatpush2.bf16.msra.mxu0 0
        %2014 = vmatprep.subr.bf16.mxu0 0
        %2015 = vmatpush2.bf16.msra.mxu0 0
        %2016 = vmatprep.subr.bf16.mxu0 0
        %2017 = vmatpush2.bf16.msra.mxu0 0
        %2018 = vmatprep.subr.bf16.mxu0 0
        %2019 = vmatpush2.bf16.msra.mxu0 0
        %2020 = vmatprep.subr.bf16.mxu0 0
        %2021 = vmatpush2.bf16.msra.mxu0 0
        %2022 = vmatprep.mubr.bf16.mxu0 0
        %2023 = vmatmul.mubr.bf16.gmra.mxu0 %v1756
        %v2024 = vpop.f32.mrf.mxu0
        %v2025 = vadd.f32 0.0, %v2024
        %v2026 = vpop.f32.mrf.mxu0
        %v2027 = vadd.f32 0.0, %v2026
        %v2028 = vpop.f32.mrf.mxu0
        %v2029 = vpop.f32.mrf.mxu0
        %2030 = vdwg.mxu0
        %v2031 = vxor.u32 %v1984, 2147483648
        %v2032 = vxor.u32 %v1986, 2147483648
        %v2033 = vmul.f32 %v2031, 1.442695
        %v2034 = vpow.pop %v2033
        %v2035 = vmul.f32 %v2032, 1.442695
        %v2036 = vpow.pop %v2035
        %v2037 = vadd.f32 %v2034, 1.0
        %v2038 = vadd.f32 %v2036, 1.0
        %v2039 = vrcp.pop %v2037
        %v2040 = vmul.f32 1.0, %v2039
        %v2041 = vrcp.pop %v2038
        %v2042 = vmul.f32 1.0, %v2041
        %v2043 = vmul.f32 %v1984, %v2040
        %v2044 = vmul.f32 %v1986, %v2042
        %v2045 = vmul.f32 %v2043, %v2025
        %v2046 = vmul.f32 %v2044, %v2027
        %v2047 = vpack.c.bf16 %v2045, %v2045
        %v2048 = vpack.c.bf16 %v2046, %v2046
        %v2049 = vld [vmem:[#allocation10] sm:$0xf]
        %v2050 = vld [vmem:[#allocation10 + $0x4] sm:$0xf]
        %v2051 = vld [vmem:[#allocation10 + $0x8] sm:$0xf]
        %v2052 = vld [vmem:[#allocation10 + $0xc] sm:$0xf]
        %v2053 = vld [vmem:[#allocation10 + $0x10] sm:$0xf]
        %v2054 = vld [vmem:[#allocation10 + $0x14] sm:$0xf]
        %v2055 = vld [vmem:[#allocation10 + $0x18] sm:$0xf]
        %v2056 = vld [vmem:[#allocation10 + $0x1c] sm:$0xf]
        %v2057 = vld [vmem:[#allocation10 + $0x20] sm:$0xf]
        %v2058 = vld [vmem:[#allocation10 + $0x24] sm:$0xf]
        %v2059 = vld [vmem:[#allocation10 + $0x28] sm:$0xf]
        %v2060 = vld [vmem:[#allocation10 + $0x2c] sm:$0xf]
        %v2061 = vld [vmem:[#allocation10 + $0x30] sm:$0xf]
        %v2062 = vld [vmem:[#allocation10 + $0x34] sm:$0xf]
        %v2063 = vld [vmem:[#allocation10 + $0x38] sm:$0xf]
        %v2064 = vld [vmem:[#allocation10 + $0x3c] sm:$0xf]
        %v2065 = vld [vmem:[#allocation10 + $0x40] sm:$0xf]
        %v2066 = vld [vmem:[#allocation10 + $0x44] sm:$0xf]
        %v2067 = vld [vmem:[#allocation10 + $0x48] sm:$0xf]
        %v2068 = vld [vmem:[#allocation10 + $0x4c] sm:$0xf]
        %v2069 = vld [vmem:[#allocation10 + $0x50] sm:$0xf]
        %v2070 = vld [vmem:[#allocation10 + $0x54] sm:$0xf]
        %v2071 = vld [vmem:[#allocation10 + $0x58] sm:$0xf]
        %v2072 = vld [vmem:[#allocation10 + $0x5c] sm:$0xf]
        %v2073 = vld [vmem:[#allocation10 + $0x60] sm:$0xf]
        %v2074 = vld [vmem:[#allocation10 + $0x64] sm:$0xf]
        %v2075 = vld [vmem:[#allocation10 + $0x68] sm:$0xf]
        %v2076 = vld [vmem:[#allocation10 + $0x6c] sm:$0xf]
        %v2077 = vld [vmem:[#allocation10 + $0x70] sm:$0xf]
        %v2078 = vld [vmem:[#allocation10 + $0x74] sm:$0xf]
        %v2079 = vld [vmem:[#allocation10 + $0x78] sm:$0xf]
        %v2080 = vld [vmem:[#allocation10 + $0x7c] sm:$0xf]
        %v2113 = vunpack.c.l.b16 %v2049
        %v2114 = vunpack.c.l.b16 %v2050
        %v2115 = vunpack.c.l.b16 %v2051
        %v2116 = vunpack.c.l.b16 %v2052
        %v2117 = vunpack.c.l.b16 %v2053
        %v2118 = vunpack.c.l.b16 %v2054
        %v2119 = vunpack.c.l.b16 %v2055
        %v2120 = vunpack.c.l.b16 %v2056
        %v2121 = vunpack.c.l.b16 %v2057
        %v2122 = vunpack.c.l.b16 %v2058
        %v2123 = vunpack.c.l.b16 %v2059
        %v2124 = vunpack.c.l.b16 %v2060
        %v2125 = vunpack.c.l.b16 %v2061
        %v2126 = vunpack.c.l.b16 %v2062
        %v2127 = vunpack.c.l.b16 %v2063
        %v2128 = vunpack.c.l.b16 %v2064
        %v2129 = vunpack.c.l.b16 %v2065
        %v2130 = vunpack.c.l.b16 %v2066
        %v2131 = vunpack.c.l.b16 %v2067
        %v2132 = vunpack.c.l.b16 %v2068
        %v2133 = vunpack.c.l.b16 %v2069
        %v2134 = vunpack.c.l.b16 %v2070
        %v2135 = vunpack.c.l.b16 %v2071
        %v2136 = vunpack.c.l.b16 %v2072
        %v2137 = vunpack.c.l.b16 %v2073
        %v2138 = vunpack.c.l.b16 %v2074
        %v2139 = vunpack.c.l.b16 %v2075
        %v2140 = vunpack.c.l.b16 %v2076
        %v2141 = vunpack.c.l.b16 %v2077
        %v2142 = vunpack.c.l.b16 %v2078
        %v2143 = vunpack.c.l.b16 %v2079
        %v2144 = vunpack.c.l.b16 %v2080
        %v2145 = vpack.c.b16 %v2114, %v2113
        %v2146 = vpack.c.b16 %v2116, %v2115
        %v2147 = vpack.c.b16 %v2118, %v2117
        %v2148 = vpack.c.b16 %v2120, %v2119
        %v2149 = vpack.c.b16 %v2122, %v2121
        %v2150 = vpack.c.b16 %v2124, %v2123
        %v2151 = vpack.c.b16 %v2126, %v2125
        %v2152 = vpack.c.b16 %v2128, %v2127
        %v2153 = vpack.c.b16 %v2130, %v2129
        %v2154 = vpack.c.b16 %v2132, %v2131
        %v2155 = vpack.c.b16 %v2134, %v2133
        %v2156 = vpack.c.b16 %v2136, %v2135
        %v2157 = vpack.c.b16 %v2138, %v2137
        %v2158 = vpack.c.b16 %v2140, %v2139
        %v2159 = vpack.c.b16 %v2142, %v2141
        %v2160 = vpack.c.b16 %v2144, %v2143
        %2177 = vmatprep.subr.bf16.mxu0 0
        %2178 = vmatpush1.bf16.msra.mxu0 %v2152
        %2179 = vmatprep.subr.bf16.mxu0 0
        %2180 = vmatpush1.bf16.msra.mxu0 %v2151
        %2181 = vmatprep.subr.bf16.mxu0 0
        %2182 = vmatpush1.bf16.msra.mxu0 %v2150
        %2183 = vmatprep.subr.bf16.mxu0 0
        %2184 = vmatpush1.bf16.msra.mxu0 %v2149
        %2185 = vmatprep.subr.bf16.mxu0 0
        %2186 = vmatpush1.bf16.msra.mxu0 %v2148
        %2187 = vmatprep.subr.bf16.mxu0 0
        %2188 = vmatpush1.bf16.msra.mxu0 %v2147
        %2189 = vmatprep.subr.bf16.mxu0 0
        %2190 = vmatpush1.bf16.msra.mxu0 %v2146
        %2191 = vmatprep.subr.bf16.mxu0 0
        %2192 = vmatpush1.bf16.msra.mxu0 %v2145
        %2193 = vmatprep.subr.bf16.mxu0 0
        %2194 = vmatpush2.bf16.msra.mxu0 %v2160
        %2195 = vmatprep.subr.bf16.mxu0 0
        %2196 = vmatpush2.bf16.msra.mxu0 %v2159
        %2197 = vmatprep.subr.bf16.mxu0 0
        %2198 = vmatpush2.bf16.msra.mxu0 %v2158
        %2199 = vmatprep.subr.bf16.mxu0 0
        %2200 = vmatpush2.bf16.msra.mxu0 %v2157
        %2201 = vmatprep.subr.bf16.mxu0 0
        %2202 = vmatpush2.bf16.msra.mxu0 %v2156
        %2203 = vmatprep.subr.bf16.mxu0 0
        %2204 = vmatpush2.bf16.msra.mxu0 %v2155
        %2205 = vmatprep.subr.bf16.mxu0 0
        %2206 = vmatpush2.bf16.msra.mxu0 %v2154
        %2207 = vmatprep.subr.bf16.mxu0 0
        %2208 = vmatpush2.bf16.msra.mxu0 %v2153
        %2209 = vmatprep.mubr.bf16.mxu0 %v2048
        %2210 = vmatmul.mubr.bf16.gmra.mxu0 %v2047
        %v2211 = vpop.f32.mrf.mxu0
        %v2212 = vadd.f32 0.0, %v2211
        %v2213 = vpop.f32.mrf.mxu0
        %v2214 = vpop.f32.mrf.mxu0
        %v2215 = vpop.f32.mrf.mxu0
        %2216 = vdwg.mxu0
        %v2217 = vadd.f32 %v1740, %v2212
        %2218 = vst [vmem:[%s351] sm:$0xff] %v2217
        %s2219 = sand.u32 %s186, 1
        %s2220 = scalar_lea.sflag [#allocation4], %s2219
        %s2221 = sand.u32 %s186, 1
        %s2222 = smul.addr %s2221, 8
        %s2223 = scalar_lea.vmem [#allocation11], %s2222
        // Predicated region
        $region69: #{tpu_custom_call.1} parent=47 // pred_check
          %p2224 = pneg %p196
        $region70: #{tpu_custom_call.1} parent=47 // pred_check_branch
          %2226 = sbr.rel (%p2224) target = $region72
        $region71: #{tpu_custom_call.1} parent=47 // pred_region
          %s2228 = ssub.s32 128, 128
          %2229 = vsyncadd %s2220, %s2228
          %s2230 = smul.addr %s26, 128
          %s2231 = scalar_lea.hbm %s7, %s2230
          %s2233 = sshll.u32 %s2223, 4
          %s2234 = int_to_ptr.vmem [resolvable:$true] %s2233
          %2236 = dma.vmem_to_hbm [thread:$0]  %s2234, 128, %s2231, %s2220
        $region72: #{tpu_custom_call.1} parent=47 // pred_fallthru
          _
      $region48: #{tpu_custom_call.1} parent=5 // pred_fallthru
        _
      %p2237 = scmp.le.s32.totalorder 2, %s21
      // Predicated region
      $region73: #{tpu_custom_call.1} parent=5 // pred_check
        %p2238 = pneg %p2237
      $region74: #{tpu_custom_call.1} parent=5 // pred_check_branch
        %2240 = sbr.rel (%p2238) target = $region76
      $region75: #{tpu_custom_call.1} parent=5 // pred_region
        %s2241 = ssub.s32 %s21, 2
        // Predicated region
        $region77: #{tpu_custom_call.1} parent=75 // pred_check
          %p2242 = pneg %p202
        $region78: #{tpu_custom_call.1} parent=75 // pred_check_branch
          %2244 = sbr.rel (%p2242) target = $region80
        $region79: #{tpu_custom_call.1} parent=75 // pred_region
          %s2245 = sand.u32 %s187, 1
          %s2246 = scalar_lea.sflag [#allocation4], %s2245
          %s2247 = sand.u32 %s187, 1
          %s2248 = smul.addr %s2247, 8
          %s2249 = scalar_lea.vmem [#allocation11], %s2248
          %2250 = dma.done %s2246, 128
        $region80: #{tpu_custom_call.1} parent=75 // pred_fallthru
          _
      $region76: #{tpu_custom_call.1} parent=5 // pred_fallthru
        _
    $region6: #{tpu_custom_call.1} parent=1 // loop_footer
      %s25 = sadd.s32 1, %s21
    $region7: #{tpu_custom_call.1} parent=1 // loop_footer_branch
      %20 = sbr.rel target = $region3
    $region8: #{tpu_custom_call.1} parent=1 // loop_exit
      _
    %2251 = vsyncpa [#allocation3], 1
    %s2252 = scalar_lea.sflag [#allocation3], 1
    %2253 = vsyncpa %s2252, 1
    %2254 = vsyncpa [#allocation6], 1
    %2255 = vsyncpa [#allocation9], 1
    %2256 = vsyncpa [#allocation4], 1
    %s2257 = scalar_lea.sflag [#allocation4], 1
    %2258 = vsyncpa %s2257, 1

</llo_original>
